<compile_context>
chip_gen: v7x
topology: tpu7x:2x2x1
jax: 0.10.0
libtpu: 0.0.40
codegen_flags: <defaults>
</compile_context>

<pallas_src>
import functools

import jax
import jax.numpy as jnp
from jax.experimental import pallas as pl
from jax.experimental.pallas import tpu as pltpu


def _padded_block_bytes(shape, itemsize):
    """Approximate VMEM footprint of one buffer (last two dims padded to (8, 128))."""
    s = [int(d) for d in shape]
    if len(s) >= 1:
        s[-1] = -(-s[-1] // 128) * 128
    if len(s) >= 2:
        s[-2] = -(-s[-2] // 8) * 8
    n = 1
    for d in s:
        n *= d
    return n * itemsize


def _choose_h_block(Ho, Ph, H, C, Pt, W, Wo, K, itemsize, budget_bytes=12 * 2**20):
    """Largest output-row block h_blk such that
       * h_blk divides Ho,
       * the input block's sublane dim (h_blk*Ph) is a multiple of 8 or equals H,
       * double-buffered input+output blocks fit a conservative VMEM budget."""
    valid = [hb for hb in range(1, Ho + 1)
             if Ho % hb == 0 and (hb * Ph == H or (hb * Ph) % 8 == 0)]
    for hb in sorted(valid, reverse=True):
        need = 2 * (_padded_block_bytes((1, C, Pt, hb * Ph, W), itemsize)
                    + _padded_block_bytes((1, 1, hb, Wo, K), itemsize))
        if need <= budget_bytes:
            return hb
    return valid[0]  # smallest legal block (always exists: hb == Ho gives hb*Ph == H)


def _patchify_kernel(x_ref, o_ref, xt_ref, *, C, Pt, Ph, Pw, Wo, h_blk):
    # x_ref : (1, C, Pt, h_blk*Ph, W)  input slab for this (batch, t-block, h-block)
    # o_ref : (1, 1, h_blk, Wo, K)     output patch tokens, K = Pt*Ph*Pw*C (lane axis)
    # xt_ref: (W, C) VMEM scratch      one transposed (width, channel) row slab
    #
    # Every (dt, dh, dw) triple owns a disjoint, contiguous lane slice of width C
    # in the output, so each piece is written exactly once (no accumulation).
    for dt in range(Pt):
        for dh in range(Ph):
            q0 = (dt * Ph + dh) * Pw
            for ho in range(h_blk):
                # all channels of one input image row -> (C, W), native dtype
                x_cw = x_ref[0, :, dt, ho * Ph + dh, :]
                # move channels onto lanes with a single 2-D transpose, park in VMEM
                xt_ref[...] = x_cw.T                                  # (Wo*Pw, C)
                for dw in range(Pw):
                    # sublane-strided de-interleave: rows dw, dw+Pw, dw+2*Pw, ...
                    piece = xt_ref[pl.ds(dw, Wo, stride=Pw), :]       # (Wo, C)
                    # contiguous lane slice of the final layout (pure placement)
                    o_ref[0, 0, ho, :, (q0 + dw) * C:(q0 + dw + 1) * C] = piece


def image_to_patch_tokens(img: jax.Array, patch_size: tuple) -> jax.Array:
    """Pallas equivalent of ImageToPatchTokens.forward.

    img: (B, C, T, H, W)  ->  patches: (B, T/Pt, H/Ph, W/Pw, Pt*Ph*Pw*C)
    """
    B, C, T, H, W = img.shape
    Pt, Ph, Pw = patch_size
    assert T % Pt == 0 and H % Ph == 0 and W % Pw == 0
    To, Ho, Wo = T // Pt, H // Ph, W // Pw
    K = Pt * Ph * Pw * C
    itemsize = jnp.dtype(img.dtype).itemsize

    h_blk = _choose_h_block(Ho, Ph, H, C, Pt, W, Wo, K, itemsize)
    n_hb = Ho // h_blk

    in_block = (1, C, Pt, h_blk * Ph, W)
    out_block = (1, 1, h_blk, Wo, K)
    need = (2 * (_padded_block_bytes(in_block, itemsize)
                 + _padded_block_bytes(out_block, itemsize))
            + _padded_block_bytes((W, C), itemsize))
    vmem_limit = int(max(16 * 2**20, min(96 * 2**20, need + 8 * 2**20)))

    kernel = functools.partial(_patchify_kernel, C=C, Pt=Pt, Ph=Ph, Pw=Pw,
                               Wo=Wo, h_blk=h_blk)

    return pl.pallas_call(
        kernel,
        out_shape=jax.ShapeDtypeStruct((B, To, Ho, Wo, K), img.dtype),
        grid=(B, To, n_hb),
        in_specs=[pl.BlockSpec(in_block, lambda b, t, h: (b, 0, t, h, 0))],
        out_specs=pl.BlockSpec(out_block, lambda b, t, h: (b, t, h, 0, 0)),
        scratch_shapes=[pltpu.VMEM((W, C), img.dtype)],
        compiler_params=pltpu.CompilerParams(
            dimension_semantics=("parallel", "parallel", "parallel"),
            vmem_limit_bytes=vmem_limit),
    )(img)


def _reference_patchify(img: jax.Array, patch_size: tuple) -> jax.Array:
    """Plain-JAX einops-equivalent reference for validation."""
    B, C, T, H, W = img.shape
    Pt, Ph, Pw = patch_size
    x = img.reshape(B, C, T // Pt, Pt, H // Ph, Ph, W // Pw, Pw)
    x = jnp.transpose(x, (0, 2, 4, 6, 3, 5, 7, 1))  # b t h w dt dh dw c
    return x.reshape(B, T // Pt, H // Ph, W // Pw, Pt * Ph * Pw * C)


if __name__ == "__main__":
    key = jax.random.PRNGKey(0)
    B, C, T, H, W = 2, 4, 4, 8, 8
    patch_size = (2, 2, 2)

    img = jax.random.normal(key, (B, C, T, H, W), dtype=jnp.float32)

    out = jax.block_until_ready(image_to_patch_tokens(img, patch_size))
    ref = _reference_patchify(img, patch_size)

    assert out.shape == (B, T // 2, H // 2, W // 2, 2 * 2 * 2 * C), out.shape
    assert out.dtype == img.dtype
    assert bool(jnp.all(out == ref)), "mismatch vs reference"

    print("KERNEL_OK")
</pallas_src>

<mosaic_0001>
module attributes {stable_mosaic.version = 11 : i64} {
  func.func @_patchify_kernel(%arg0: i32, %arg1: i32, %arg2: i32, %arg3: memref<1x4x2x8x8xf32, #tpu.memory_space<vmem>>, %arg4: memref<1x1x4x4x32xf32, #tpu.memory_space<vmem>>, %arg5: memref<8x4xf32, #tpu.memory_space<vmem>>) attributes {dimension_semantics = [#tpu.dimension_semantics<parallel>, #tpu.dimension_semantics<parallel>, #tpu.dimension_semantics<parallel>], iteration_bounds = array<i64: 2, 2, 1>, scalar_prefetch = 0 : i64, scratch_operands = 1 : i64, tpu.core_type = #tpu.core_type<tc>, window_params = [{transform_indices = @transform_0, window_bounds = array<i64: 1, 4, 2, 8, 8>}, {transform_indices = @transform_1, window_bounds = array<i64: 1, 1, 4, 4, 32>}]} {
    %c0 = arith.constant 0 : index
    %c0_0 = arith.constant 0 : index
    %c0_1 = arith.constant 0 : index
    %c0_2 = arith.constant 0 : index
    %c0_3 = arith.constant 0 : index
    %0 = vector.load %arg3[%c0, %c0_0, %c0_1, %c0_2, %c0_3] : memref<1x4x2x8x8xf32, #tpu.memory_space<vmem>>, vector<1x4x1x1x8xf32>
    %1 = vector.shape_cast %0 : vector<1x4x1x1x8xf32> to vector<4x8xf32>
    %2 = tpu.transpose %1, [1, 0] : vector<4x8xf32> -> vector<8x4xf32>
    %c0_4 = arith.constant 0 : index
    %c0_5 = arith.constant 0 : index
    %3 = vector.load %arg5[%c0_4, %c0_5] : memref<8x4xf32, #tpu.memory_space<vmem>>, vector<8x4xf32>
    tpu.vector_store %arg5[%c0_4, %c0_5], %2 {strides = array<i32>} : memref<8x4xf32, #tpu.memory_space<vmem>>, vector<8x4xf32>,
    %c0_6 = arith.constant 0 : index
    %c0_7 = arith.constant 0 : index
    %4 = tpu.strided_load %arg5[%c0_6, %c0_7] {strides = array<i32: 2, 1>} : memref<8x4xf32, #tpu.memory_space<vmem>>, vector<4x4xf32>
    %c0_8 = arith.constant 0 : index
    %c0_9 = arith.constant 0 : index
    %c0_10 = arith.constant 0 : index
    %c0_11 = arith.constant 0 : index
    %c0_12 = arith.constant 0 : index
    %5 = vector.load %arg4[%c0_8, %c0_9, %c0_10, %c0_11, %c0_12] : memref<1x1x4x4x32xf32, #tpu.memory_space<vmem>>, vector<1x1x1x4x4xf32>
    %6 = vector.shape_cast %5 : vector<1x1x1x4x4xf32> to vector<4x4xf32>
    %7 = vector.shape_cast %4 : vector<4x4xf32> to vector<1x1x1x4x4xf32>
    tpu.vector_store %arg4[%c0_8, %c0_9, %c0_10, %c0_11, %c0_12], %7 {strides = array<i32>} : memref<1x1x4x4x32xf32, #tpu.memory_space<vmem>>, vector<1x1x1x4x4xf32>,
    %c1 = arith.constant 1 : index
    %c0_13 = arith.constant 0 : index
    %8 = tpu.strided_load %arg5[%c1, %c0_13] {strides = array<i32: 2, 1>} : memref<8x4xf32, #tpu.memory_space<vmem>>, vector<4x4xf32>
    %c0_14 = arith.constant 0 : index
    %c0_15 = arith.constant 0 : index
    %c0_16 = arith.constant 0 : index
    %c0_17 = arith.constant 0 : index
    %c4 = arith.constant 4 : index
    %9 = vector.load %arg4[%c0_14, %c0_15, %c0_16, %c0_17, %c4] : memref<1x1x4x4x32xf32, #tpu.memory_space<vmem>>, vector<1x1x1x4x4xf32>
    %10 = vector.shape_cast %9 : vector<1x1x1x4x4xf32> to vector<4x4xf32>
    %11 = vector.shape_cast %8 : vector<4x4xf32> to vector<1x1x1x4x4xf32>
    tpu.vector_store %arg4[%c0_14, %c0_15, %c0_16, %c0_17, %c4], %11 {strides = array<i32>} : memref<1x1x4x4x32xf32, #tpu.memory_space<vmem>>, vector<1x1x1x4x4xf32>,
    %c0_18 = arith.constant 0 : index
    %c0_19 = arith.constant 0 : index
    %c0_20 = arith.constant 0 : index
    %c2 = arith.constant 2 : index
    %c0_21 = arith.constant 0 : index
    %12 = vector.load %arg3[%c0_18, %c0_19, %c0_20, %c2, %c0_21] : memref<1x4x2x8x8xf32, #tpu.memory_space<vmem>>, vector<1x4x1x1x8xf32>
    %13 = vector.shape_cast %12 : vector<1x4x1x1x8xf32> to vector<4x8xf32>
    %14 = tpu.transpose %13, [1, 0] : vector<4x8xf32> -> vector<8x4xf32>
    %c0_22 = arith.constant 0 : index
    %c0_23 = arith.constant 0 : index
    %15 = vector.load %arg5[%c0_22, %c0_23] : memref<8x4xf32, #tpu.memory_space<vmem>>, vector<8x4xf32>
    tpu.vector_store %arg5[%c0_22, %c0_23], %14 {strides = array<i32>} : memref<8x4xf32, #tpu.memory_space<vmem>>, vector<8x4xf32>,
    %c0_24 = arith.constant 0 : index
    %c0_25 = arith.constant 0 : index
    %16 = tpu.strided_load %arg5[%c0_24, %c0_25] {strides = array<i32: 2, 1>} : memref<8x4xf32, #tpu.memory_space<vmem>>, vector<4x4xf32>
    %c0_26 = arith.constant 0 : index
    %c0_27 = arith.constant 0 : index
    %c1_28 = arith.constant 1 : index
    %c0_29 = arith.constant 0 : index
    %c0_30 = arith.constant 0 : index
    %17 = vector.load %arg4[%c0_26, %c0_27, %c1_28, %c0_29, %c0_30] : memref<1x1x4x4x32xf32, #tpu.memory_space<vmem>>, vector<1x1x1x4x4xf32>
    %18 = vector.shape_cast %17 : vector<1x1x1x4x4xf32> to vector<4x4xf32>
    %19 = vector.shape_cast %16 : vector<4x4xf32> to vector<1x1x1x4x4xf32>
    tpu.vector_store %arg4[%c0_26, %c0_27, %c1_28, %c0_29, %c0_30], %19 {strides = array<i32>} : memref<1x1x4x4x32xf32, #tpu.memory_space<vmem>>, vector<1x1x1x4x4xf32>,
    %c1_31 = arith.constant 1 : index
    %c0_32 = arith.constant 0 : index
    %20 = tpu.strided_load %arg5[%c1_31, %c0_32] {strides = array<i32: 2, 1>} : memref<8x4xf32, #tpu.memory_space<vmem>>, vector<4x4xf32>
    %c0_33 = arith.constant 0 : index
    %c0_34 = arith.constant 0 : index
    %c1_35 = arith.constant 1 : index
    %c0_36 = arith.constant 0 : index
    %c4_37 = arith.constant 4 : index
    %21 = vector.load %arg4[%c0_33, %c0_34, %c1_35, %c0_36, %c4_37] : memref<1x1x4x4x32xf32, #tpu.memory_space<vmem>>, vector<1x1x1x4x4xf32>
    %22 = vector.shape_cast %21 : vector<1x1x1x4x4xf32> to vector<4x4xf32>
    %23 = vector.shape_cast %20 : vector<4x4xf32> to vector<1x1x1x4x4xf32>
    tpu.vector_store %arg4[%c0_33, %c0_34, %c1_35, %c0_36, %c4_37], %23 {strides = array<i32>} : memref<1x1x4x4x32xf32, #tpu.memory_space<vmem>>, vector<1x1x1x4x4xf32>,
    %c0_38 = arith.constant 0 : index
    %c0_39 = arith.constant 0 : index
    %c0_40 = arith.constant 0 : index
    %c4_41 = arith.constant 4 : index
    %c0_42 = arith.constant 0 : index
    %24 = vector.load %arg3[%c0_38, %c0_39, %c0_40, %c4_41, %c0_42] : memref<1x4x2x8x8xf32, #tpu.memory_space<vmem>>, vector<1x4x1x1x8xf32>
    %25 = vector.shape_cast %24 : vector<1x4x1x1x8xf32> to vector<4x8xf32>
    %26 = tpu.transpose %25, [1, 0] : vector<4x8xf32> -> vector<8x4xf32>
    %c0_43 = arith.constant 0 : index
    %c0_44 = arith.constant 0 : index
    %27 = vector.load %arg5[%c0_43, %c0_44] : memref<8x4xf32, #tpu.memory_space<vmem>>, vector<8x4xf32>
    tpu.vector_store %arg5[%c0_43, %c0_44], %26 {strides = array<i32>} : memref<8x4xf32, #tpu.memory_space<vmem>>, vector<8x4xf32>,
    %c0_45 = arith.constant 0 : index
    %c0_46 = arith.constant 0 : index
    %28 = tpu.strided_load %arg5[%c0_45, %c0_46] {strides = array<i32: 2, 1>} : memref<8x4xf32, #tpu.memory_space<vmem>>, vector<4x4xf32>
    %c0_47 = arith.constant 0 : index
    %c0_48 = arith.constant 0 : index
    %c2_49 = arith.constant 2 : index
    %c0_50 = arith.constant 0 : index
    %c0_51 = arith.constant 0 : index
    %29 = vector.load %arg4[%c0_47, %c0_48, %c2_49, %c0_50, %c0_51] : memref<1x1x4x4x32xf32, #tpu.memory_space<vmem>>, vector<1x1x1x4x4xf32>
    %30 = vector.shape_cast %29 : vector<1x1x1x4x4xf32> to vector<4x4xf32>
    %31 = vector.shape_cast %28 : vector<4x4xf32> to vector<1x1x1x4x4xf32>
    tpu.vector_store %arg4[%c0_47, %c0_48, %c2_49, %c0_50, %c0_51], %31 {strides = array<i32>} : memref<1x1x4x4x32xf32, #tpu.memory_space<vmem>>, vector<1x1x1x4x4xf32>,
    %c1_52 = arith.constant 1 : index
    %c0_53 = arith.constant 0 : index
    %32 = tpu.strided_load %arg5[%c1_52, %c0_53] {strides = array<i32: 2, 1>} : memref<8x4xf32, #tpu.memory_space<vmem>>, vector<4x4xf32>
    %c0_54 = arith.constant 0 : index
    %c0_55 = arith.constant 0 : index
    %c2_56 = arith.constant 2 : index
    %c0_57 = arith.constant 0 : index
    %c4_58 = arith.constant 4 : index
    %33 = vector.load %arg4[%c0_54, %c0_55, %c2_56, %c0_57, %c4_58] : memref<1x1x4x4x32xf32, #tpu.memory_space<vmem>>, vector<1x1x1x4x4xf32>
    %34 = vector.shape_cast %33 : vector<1x1x1x4x4xf32> to vector<4x4xf32>
    %35 = vector.shape_cast %32 : vector<4x4xf32> to vector<1x1x1x4x4xf32>
    tpu.vector_store %arg4[%c0_54, %c0_55, %c2_56, %c0_57, %c4_58], %35 {strides = array<i32>} : memref<1x1x4x4x32xf32, #tpu.memory_space<vmem>>, vector<1x1x1x4x4xf32>,
    %c0_59 = arith.constant 0 : index
    %c0_60 = arith.constant 0 : index
    %c0_61 = arith.constant 0 : index
    %c6 = arith.constant 6 : index
    %c0_62 = arith.constant 0 : index
    %36 = vector.load %arg3[%c0_59, %c0_60, %c0_61, %c6, %c0_62] : memref<1x4x2x8x8xf32, #tpu.memory_space<vmem>>, vector<1x4x1x1x8xf32>
    %37 = vector.shape_cast %36 : vector<1x4x1x1x8xf32> to vector<4x8xf32>
    %38 = tpu.transpose %37, [1, 0] : vector<4x8xf32> -> vector<8x4xf32>
    %c0_63 = arith.constant 0 : index
    %c0_64 = arith.constant 0 : index
    %39 = vector.load %arg5[%c0_63, %c0_64] : memref<8x4xf32, #tpu.memory_space<vmem>>, vector<8x4xf32>
    tpu.vector_store %arg5[%c0_63, %c0_64], %38 {strides = array<i32>} : memref<8x4xf32, #tpu.memory_space<vmem>>, vector<8x4xf32>,
    %c0_65 = arith.constant 0 : index
    %c0_66 = arith.constant 0 : index
    %40 = tpu.strided_load %arg5[%c0_65, %c0_66] {strides = array<i32: 2, 1>} : memref<8x4xf32, #tpu.memory_space<vmem>>, vector<4x4xf32>
    %c0_67 = arith.constant 0 : index
    %c0_68 = arith.constant 0 : index
    %c3 = arith.constant 3 : index
    %c0_69 = arith.constant 0 : index
    %c0_70 = arith.constant 0 : index
    %41 = vector.load %arg4[%c0_67, %c0_68, %c3, %c0_69, %c0_70] : memref<1x1x4x4x32xf32, #tpu.memory_space<vmem>>, vector<1x1x1x4x4xf32>
    %42 = vector.shape_cast %41 : vector<1x1x1x4x4xf32> to vector<4x4xf32>
    %43 = vector.shape_cast %40 : vector<4x4xf32> to vector<1x1x1x4x4xf32>
    tpu.vector_store %arg4[%c0_67, %c0_68, %c3, %c0_69, %c0_70], %43 {strides = array<i32>} : memref<1x1x4x4x32xf32, #tpu.memory_space<vmem>>, vector<1x1x1x4x4xf32>,
    %c1_71 = arith.constant 1 : index
    %c0_72 = arith.constant 0 : index
    %44 = tpu.strided_load %arg5[%c1_71, %c0_72] {strides = array<i32: 2, 1>} : memref<8x4xf32, #tpu.memory_space<vmem>>, vector<4x4xf32>
    %c0_73 = arith.constant 0 : index
    %c0_74 = arith.constant 0 : index
    %c3_75 = arith.constant 3 : index
    %c0_76 = arith.constant 0 : index
    %c4_77 = arith.constant 4 : index
    %45 = vector.load %arg4[%c0_73, %c0_74, %c3_75, %c0_76, %c4_77] : memref<1x1x4x4x32xf32, #tpu.memory_space<vmem>>, vector<1x1x1x4x4xf32>
    %46 = vector.shape_cast %45 : vector<1x1x1x4x4xf32> to vector<4x4xf32>
    %47 = vector.shape_cast %44 : vector<4x4xf32> to vector<1x1x1x4x4xf32>
    tpu.vector_store %arg4[%c0_73, %c0_74, %c3_75, %c0_76, %c4_77], %47 {strides = array<i32>} : memref<1x1x4x4x32xf32, #tpu.memory_space<vmem>>, vector<1x1x1x4x4xf32>,
    %c0_78 = arith.constant 0 : index
    %c0_79 = arith.constant 0 : index
    %c0_80 = arith.constant 0 : index
    %c1_81 = arith.constant 1 : index
    %c0_82 = arith.constant 0 : index
    %48 = vector.load %arg3[%c0_78, %c0_79, %c0_80, %c1_81, %c0_82] : memref<1x4x2x8x8xf32, #tpu.memory_space<vmem>>, vector<1x4x1x1x8xf32>
    %49 = vector.shape_cast %48 : vector<1x4x1x1x8xf32> to vector<4x8xf32>
    %50 = tpu.transpose %49, [1, 0] : vector<4x8xf32> -> vector<8x4xf32>
    %c0_83 = arith.constant 0 : index
    %c0_84 = arith.constant 0 : index
    %51 = vector.load %arg5[%c0_83, %c0_84] : memref<8x4xf32, #tpu.memory_space<vmem>>, vector<8x4xf32>
    tpu.vector_store %arg5[%c0_83, %c0_84], %50 {strides = array<i32>} : memref<8x4xf32, #tpu.memory_space<vmem>>, vector<8x4xf32>,
    %c0_85 = arith.constant 0 : index
    %c0_86 = arith.constant 0 : index
    %52 = tpu.strided_load %arg5[%c0_85, %c0_86] {strides = array<i32: 2, 1>} : memref<8x4xf32, #tpu.memory_space<vmem>>, vector<4x4xf32>
    %c0_87 = arith.constant 0 : index
    %c0_88 = arith.constant 0 : index
    %c0_89 = arith.constant 0 : index
    %c0_90 = arith.constant 0 : index
    %c8 = arith.constant 8 : index
    %53 = vector.load %arg4[%c0_87, %c0_88, %c0_89, %c0_90, %c8] : memref<1x1x4x4x32xf32, #tpu.memory_space<vmem>>, vector<1x1x1x4x4xf32>
    %54 = vector.shape_cast %53 : vector<1x1x1x4x4xf32> to vector<4x4xf32>
    %55 = vector.shape_cast %52 : vector<4x4xf32> to vector<1x1x1x4x4xf32>
    tpu.vector_store %arg4[%c0_87, %c0_88, %c0_89, %c0_90, %c8], %55 {strides = array<i32>} : memref<1x1x4x4x32xf32, #tpu.memory_space<vmem>>, vector<1x1x1x4x4xf32>,
    %c1_91 = arith.constant 1 : index
    %c0_92 = arith.constant 0 : index
    %56 = tpu.strided_load %arg5[%c1_91, %c0_92] {strides = array<i32: 2, 1>} : memref<8x4xf32, #tpu.memory_space<vmem>>, vector<4x4xf32>
    %c0_93 = arith.constant 0 : index
    %c0_94 = arith.constant 0 : index
    %c0_95 = arith.constant 0 : index
    %c0_96 = arith.constant 0 : index
    %c12 = arith.constant 12 : index
    %57 = vector.load %arg4[%c0_93, %c0_94, %c0_95, %c0_96, %c12] : memref<1x1x4x4x32xf32, #tpu.memory_space<vmem>>, vector<1x1x1x4x4xf32>
    %58 = vector.shape_cast %57 : vector<1x1x1x4x4xf32> to vector<4x4xf32>
    %59 = vector.shape_cast %56 : vector<4x4xf32> to vector<1x1x1x4x4xf32>
    tpu.vector_store %arg4[%c0_93, %c0_94, %c0_95, %c0_96, %c12], %59 {strides = array<i32>} : memref<1x1x4x4x32xf32, #tpu.memory_space<vmem>>, vector<1x1x1x4x4xf32>,
    %c0_97 = arith.constant 0 : index
    %c0_98 = arith.constant 0 : index
    %c0_99 = arith.constant 0 : index
    %c3_100 = arith.constant 3 : index
    %c0_101 = arith.constant 0 : index
    %60 = vector.load %arg3[%c0_97, %c0_98, %c0_99, %c3_100, %c0_101] : memref<1x4x2x8x8xf32, #tpu.memory_space<vmem>>, vector<1x4x1x1x8xf32>
    %61 = vector.shape_cast %60 : vector<1x4x1x1x8xf32> to vector<4x8xf32>
    %62 = tpu.transpose %61, [1, 0] : vector<4x8xf32> -> vector<8x4xf32>
    %c0_102 = arith.constant 0 : index
    %c0_103 = arith.constant 0 : index
    %63 = vector.load %arg5[%c0_102, %c0_103] : memref<8x4xf32, #tpu.memory_space<vmem>>, vector<8x4xf32>
    tpu.vector_store %arg5[%c0_102, %c0_103], %62 {strides = array<i32>} : memref<8x4xf32, #tpu.memory_space<vmem>>, vector<8x4xf32>,
    %c0_104 = arith.constant 0 : index
    %c0_105 = arith.constant 0 : index
    %64 = tpu.strided_load %arg5[%c0_104, %c0_105] {strides = array<i32: 2, 1>} : memref<8x4xf32, #tpu.memory_space<vmem>>, vector<4x4xf32>
    %c0_106 = arith.constant 0 : index
    %c0_107 = arith.constant 0 : index
    %c1_108 = arith.constant 1 : index
    %c0_109 = arith.constant 0 : index
    %c8_110 = arith.constant 8 : index
    %65 = vector.load %arg4[%c0_106, %c0_107, %c1_108, %c0_109, %c8_110] : memref<1x1x4x4x32xf32, #tpu.memory_space<vmem>>, vector<1x1x1x4x4xf32>
    %66 = vector.shape_cast %65 : vector<1x1x1x4x4xf32> to vector<4x4xf32>
    %67 = vector.shape_cast %64 : vector<4x4xf32> to vector<1x1x1x4x4xf32>
    tpu.vector_store %arg4[%c0_106, %c0_107, %c1_108, %c0_109, %c8_110], %67 {strides = array<i32>} : memref<1x1x4x4x32xf32, #tpu.memory_space<vmem>>, vector<1x1x1x4x4xf32>,
    %c1_111 = arith.constant 1 : index
    %c0_112 = arith.constant 0 : index
    %68 = tpu.strided_load %arg5[%c1_111, %c0_112] {strides = array<i32: 2, 1>} : memref<8x4xf32, #tpu.memory_space<vmem>>, vector<4x4xf32>
    %c0_113 = arith.constant 0 : index
    %c0_114 = arith.constant 0 : index
    %c1_115 = arith.constant 1 : index
    %c0_116 = arith.constant 0 : index
    %c12_117 = arith.constant 12 : index
    %69 = vector.load %arg4[%c0_113, %c0_114, %c1_115, %c0_116, %c12_117] : memref<1x1x4x4x32xf32, #tpu.memory_space<vmem>>, vector<1x1x1x4x4xf32>
    %70 = vector.shape_cast %69 : vector<1x1x1x4x4xf32> to vector<4x4xf32>
    %71 = vector.shape_cast %68 : vector<4x4xf32> to vector<1x1x1x4x4xf32>
    tpu.vector_store %arg4[%c0_113, %c0_114, %c1_115, %c0_116, %c12_117], %71 {strides = array<i32>} : memref<1x1x4x4x32xf32, #tpu.memory_space<vmem>>, vector<1x1x1x4x4xf32>,
    %c0_118 = arith.constant 0 : index
    %c0_119 = arith.constant 0 : index
    %c0_120 = arith.constant 0 : index
    %c5 = arith.constant 5 : index
    %c0_121 = arith.constant 0 : index
    %72 = vector.load %arg3[%c0_118, %c0_119, %c0_120, %c5, %c0_121] : memref<1x4x2x8x8xf32, #tpu.memory_space<vmem>>, vector<1x4x1x1x8xf32>
    %73 = vector.shape_cast %72 : vector<1x4x1x1x8xf32> to vector<4x8xf32>
    %74 = tpu.transpose %73, [1, 0] : vector<4x8xf32> -> vector<8x4xf32>
    %c0_122 = arith.constant 0 : index
    %c0_123 = arith.constant 0 : index
    %75 = vector.load %arg5[%c0_122, %c0_123] : memref<8x4xf32, #tpu.memory_space<vmem>>, vector<8x4xf32>
    tpu.vector_store %arg5[%c0_122, %c0_123], %74 {strides = array<i32>} : memref<8x4xf32, #tpu.memory_space<vmem>>, vector<8x4xf32>,
    %c0_124 = arith.constant 0 : index
    %c0_125 = arith.constant 0 : index
    %76 = tpu.strided_load %arg5[%c0_124, %c0_125] {strides = array<i32: 2, 1>} : memref<8x4xf32, #tpu.memory_space<vmem>>, vector<4x4xf32>
    %c0_126 = arith.constant 0 : index
    %c0_127 = arith.constant 0 : index
    %c2_128 = arith.constant 2 : index
    %c0_129 = arith.constant 0 : index
    %c8_130 = arith.constant 8 : index
    %77 = vector.load %arg4[%c0_126, %c0_127, %c2_128, %c0_129, %c8_130] : memref<1x1x4x4x32xf32, #tpu.memory_space<vmem>>, vector<1x1x1x4x4xf32>
    %78 = vector.shape_cast %77 : vector<1x1x1x4x4xf32> to vector<4x4xf32>
    %79 = vector.shape_cast %76 : vector<4x4xf32> to vector<1x1x1x4x4xf32>
    tpu.vector_store %arg4[%c0_126, %c0_127, %c2_128, %c0_129, %c8_130], %79 {strides = array<i32>} : memref<1x1x4x4x32xf32, #tpu.memory_space<vmem>>, vector<1x1x1x4x4xf32>,
    %c1_131 = arith.constant 1 : index
    %c0_132 = arith.constant 0 : index
    %80 = tpu.strided_load %arg5[%c1_131, %c0_132] {strides = array<i32: 2, 1>} : memref<8x4xf32, #tpu.memory_space<vmem>>, vector<4x4xf32>
    %c0_133 = arith.constant 0 : index
    %c0_134 = arith.constant 0 : index
    %c2_135 = arith.constant 2 : index
    %c0_136 = arith.constant 0 : index
    %c12_137 = arith.constant 12 : index
    %81 = vector.load %arg4[%c0_133, %c0_134, %c2_135, %c0_136, %c12_137] : memref<1x1x4x4x32xf32, #tpu.memory_space<vmem>>, vector<1x1x1x4x4xf32>
    %82 = vector.shape_cast %81 : vector<1x1x1x4x4xf32> to vector<4x4xf32>
    %83 = vector.shape_cast %80 : vector<4x4xf32> to vector<1x1x1x4x4xf32>
    tpu.vector_store %arg4[%c0_133, %c0_134, %c2_135, %c0_136, %c12_137], %83 {strides = array<i32>} : memref<1x1x4x4x32xf32, #tpu.memory_space<vmem>>, vector<1x1x1x4x4xf32>,
    %c0_138 = arith.constant 0 : index
    %c0_139 = arith.constant 0 : index
    %c0_140 = arith.constant 0 : index
    %c7 = arith.constant 7 : index
    %c0_141 = arith.constant 0 : index
    %84 = vector.load %arg3[%c0_138, %c0_139, %c0_140, %c7, %c0_141] : memref<1x4x2x8x8xf32, #tpu.memory_space<vmem>>, vector<1x4x1x1x8xf32>
    %85 = vector.shape_cast %84 : vector<1x4x1x1x8xf32> to vector<4x8xf32>
    %86 = tpu.transpose %85, [1, 0] : vector<4x8xf32> -> vector<8x4xf32>
    %c0_142 = arith.constant 0 : index
    %c0_143 = arith.constant 0 : index
    %87 = vector.load %arg5[%c0_142, %c0_143] : memref<8x4xf32, #tpu.memory_space<vmem>>, vector<8x4xf32>
    tpu.vector_store %arg5[%c0_142, %c0_143], %86 {strides = array<i32>} : memref<8x4xf32, #tpu.memory_space<vmem>>, vector<8x4xf32>,
    %c0_144 = arith.constant 0 : index
    %c0_145 = arith.constant 0 : index
    %88 = tpu.strided_load %arg5[%c0_144, %c0_145] {strides = array<i32: 2, 1>} : memref<8x4xf32, #tpu.memory_space<vmem>>, vector<4x4xf32>
    %c0_146 = arith.constant 0 : index
    %c0_147 = arith.constant 0 : index
    %c3_148 = arith.constant 3 : index
    %c0_149 = arith.constant 0 : index
    %c8_150 = arith.constant 8 : index
    %89 = vector.load %arg4[%c0_146, %c0_147, %c3_148, %c0_149, %c8_150] : memref<1x1x4x4x32xf32, #tpu.memory_space<vmem>>, vector<1x1x1x4x4xf32>
    %90 = vector.shape_cast %89 : vector<1x1x1x4x4xf32> to vector<4x4xf32>
    %91 = vector.shape_cast %88 : vector<4x4xf32> to vector<1x1x1x4x4xf32>
    tpu.vector_store %arg4[%c0_146, %c0_147, %c3_148, %c0_149, %c8_150], %91 {strides = array<i32>} : memref<1x1x4x4x32xf32, #tpu.memory_space<vmem>>, vector<1x1x1x4x4xf32>,
    %c1_151 = arith.constant 1 : index
    %c0_152 = arith.constant 0 : index
    %92 = tpu.strided_load %arg5[%c1_151, %c0_152] {strides = array<i32: 2, 1>} : memref<8x4xf32, #tpu.memory_space<vmem>>, vector<4x4xf32>
    %c0_153 = arith.constant 0 : index
    %c0_154 = arith.constant 0 : index
    %c3_155 = arith.constant 3 : index
    %c0_156 = arith.constant 0 : index
    %c12_157 = arith.constant 12 : index
    %93 = vector.load %arg4[%c0_153, %c0_154, %c3_155, %c0_156, %c12_157] : memref<1x1x4x4x32xf32, #tpu.memory_space<vmem>>, vector<1x1x1x4x4xf32>
    %94 = vector.shape_cast %93 : vector<1x1x1x4x4xf32> to vector<4x4xf32>
    %95 = vector.shape_cast %92 : vector<4x4xf32> to vector<1x1x1x4x4xf32>
    tpu.vector_store %arg4[%c0_153, %c0_154, %c3_155, %c0_156, %c12_157], %95 {strides = array<i32>} : memref<1x1x4x4x32xf32, #tpu.memory_space<vmem>>, vector<1x1x1x4x4xf32>,
    %c0_158 = arith.constant 0 : index
    %c0_159 = arith.constant 0 : index
    %c1_160 = arith.constant 1 : index
    %c0_161 = arith.constant 0 : index
    %c0_162 = arith.constant 0 : index
    %96 = vector.load %arg3[%c0_158, %c0_159, %c1_160, %c0_161, %c0_162] : memref<1x4x2x8x8xf32, #tpu.memory_space<vmem>>, vector<1x4x1x1x8xf32>
    %97 = vector.shape_cast %96 : vector<1x4x1x1x8xf32> to vector<4x8xf32>
    %98 = tpu.transpose %97, [1, 0] : vector<4x8xf32> -> vector<8x4xf32>
    %c0_163 = arith.constant 0 : index
    %c0_164 = arith.constant 0 : index
    %99 = vector.load %arg5[%c0_163, %c0_164] : memref<8x4xf32, #tpu.memory_space<vmem>>, vector<8x4xf32>
    tpu.vector_store %arg5[%c0_163, %c0_164], %98 {strides = array<i32>} : memref<8x4xf32, #tpu.memory_space<vmem>>, vector<8x4xf32>,
    %c0_165 = arith.constant 0 : index
    %c0_166 = arith.constant 0 : index
    %100 = tpu.strided_load %arg5[%c0_165, %c0_166] {strides = array<i32: 2, 1>} : memref<8x4xf32, #tpu.memory_space<vmem>>, vector<4x4xf32>
    %c0_167 = arith.constant 0 : index
    %c0_168 = arith.constant 0 : index
    %c0_169 = arith.constant 0 : index
    %c0_170 = arith.constant 0 : index
    %c16 = arith.constant 16 : index
    %101 = vector.load %arg4[%c0_167, %c0_168, %c0_169, %c0_170, %c16] : memref<1x1x4x4x32xf32, #tpu.memory_space<vmem>>, vector<1x1x1x4x4xf32>
    %102 = vector.shape_cast %101 : vector<1x1x1x4x4xf32> to vector<4x4xf32>
    %103 = vector.shape_cast %100 : vector<4x4xf32> to vector<1x1x1x4x4xf32>
    tpu.vector_store %arg4[%c0_167, %c0_168, %c0_169, %c0_170, %c16], %103 {strides = array<i32>} : memref<1x1x4x4x32xf32, #tpu.memory_space<vmem>>, vector<1x1x1x4x4xf32>,
    %c1_171 = arith.constant 1 : index
    %c0_172 = arith.constant 0 : index
    %104 = tpu.strided_load %arg5[%c1_171, %c0_172] {strides = array<i32: 2, 1>} : memref<8x4xf32, #tpu.memory_space<vmem>>, vector<4x4xf32>
    %c0_173 = arith.constant 0 : index
    %c0_174 = arith.constant 0 : index
    %c0_175 = arith.constant 0 : index
    %c0_176 = arith.constant 0 : index
    %c20 = arith.constant 20 : index
    %105 = vector.load %arg4[%c0_173, %c0_174, %c0_175, %c0_176, %c20] : memref<1x1x4x4x32xf32, #tpu.memory_space<vmem>>, vector<1x1x1x4x4xf32>
    %106 = vector.shape_cast %105 : vector<1x1x1x4x4xf32> to vector<4x4xf32>
    %107 = vector.shape_cast %104 : vector<4x4xf32> to vector<1x1x1x4x4xf32>
    tpu.vector_store %arg4[%c0_173, %c0_174, %c0_175, %c0_176, %c20], %107 {strides = array<i32>} : memref<1x1x4x4x32xf32, #tpu.memory_space<vmem>>, vector<1x1x1x4x4xf32>,
    %c0_177 = arith.constant 0 : index
    %c0_178 = arith.constant 0 : index
    %c1_179 = arith.constant 1 : index
    %c2_180 = arith.constant 2 : index
    %c0_181 = arith.constant 0 : index
    %108 = vector.load %arg3[%c0_177, %c0_178, %c1_179, %c2_180, %c0_181] : memref<1x4x2x8x8xf32, #tpu.memory_space<vmem>>, vector<1x4x1x1x8xf32>
    %109 = vector.shape_cast %108 : vector<1x4x1x1x8xf32> to vector<4x8xf32>
    %110 = tpu.transpose %109, [1, 0] : vector<4x8xf32> -> vector<8x4xf32>
    %c0_182 = arith.constant 0 : index
    %c0_183 = arith.constant 0 : index
    %111 = vector.load %arg5[%c0_182, %c0_183] : memref<8x4xf32, #tpu.memory_space<vmem>>, vector<8x4xf32>
    tpu.vector_store %arg5[%c0_182, %c0_183], %110 {strides = array<i32>} : memref<8x4xf32, #tpu.memory_space<vmem>>, vector<8x4xf32>,
    %c0_184 = arith.constant 0 : index
    %c0_185 = arith.constant 0 : index
    %112 = tpu.strided_load %arg5[%c0_184, %c0_185] {strides = array<i32: 2, 1>} : memref<8x4xf32, #tpu.memory_space<vmem>>, vector<4x4xf32>
    %c0_186 = arith.constant 0 : index
    %c0_187 = arith.constant 0 : index
    %c1_188 = arith.constant 1 : index
    %c0_189 = arith.constant 0 : index
    %c16_190 = arith.constant 16 : index
    %113 = vector.load %arg4[%c0_186, %c0_187, %c1_188, %c0_189, %c16_190] : memref<1x1x4x4x32xf32, #tpu.memory_space<vmem>>, vector<1x1x1x4x4xf32>
    %114 = vector.shape_cast %113 : vector<1x1x1x4x4xf32> to vector<4x4xf32>
    %115 = vector.shape_cast %112 : vector<4x4xf32> to vector<1x1x1x4x4xf32>
    tpu.vector_store %arg4[%c0_186, %c0_187, %c1_188, %c0_189, %c16_190], %115 {strides = array<i32>} : memref<1x1x4x4x32xf32, #tpu.memory_space<vmem>>, vector<1x1x1x4x4xf32>,
    %c1_191 = arith.constant 1 : index
    %c0_192 = arith.constant 0 : index
    %116 = tpu.strided_load %arg5[%c1_191, %c0_192] {strides = array<i32: 2, 1>} : memref<8x4xf32, #tpu.memory_space<vmem>>, vector<4x4xf32>
    %c0_193 = arith.constant 0 : index
    %c0_194 = arith.constant 0 : index
    %c1_195 = arith.constant 1 : index
    %c0_196 = arith.constant 0 : index
    %c20_197 = arith.constant 20 : index
    %117 = vector.load %arg4[%c0_193, %c0_194, %c1_195, %c0_196, %c20_197] : memref<1x1x4x4x32xf32, #tpu.memory_space<vmem>>, vector<1x1x1x4x4xf32>
    %118 = vector.shape_cast %117 : vector<1x1x1x4x4xf32> to vector<4x4xf32>
    %119 = vector.shape_cast %116 : vector<4x4xf32> to vector<1x1x1x4x4xf32>
    tpu.vector_store %arg4[%c0_193, %c0_194, %c1_195, %c0_196, %c20_197], %119 {strides = array<i32>} : memref<1x1x4x4x32xf32, #tpu.memory_space<vmem>>, vector<1x1x1x4x4xf32>,
    %c0_198 = arith.constant 0 : index
    %c0_199 = arith.constant 0 : index
    %c1_200 = arith.constant 1 : index
    %c4_201 = arith.constant 4 : index
    %c0_202 = arith.constant 0 : index
    %120 = vector.load %arg3[%c0_198, %c0_199, %c1_200, %c4_201, %c0_202] : memref<1x4x2x8x8xf32, #tpu.memory_space<vmem>>, vector<1x4x1x1x8xf32>
    %121 = vector.shape_cast %120 : vector<1x4x1x1x8xf32> to vector<4x8xf32>
    %122 = tpu.transpose %121, [1, 0] : vector<4x8xf32> -> vector<8x4xf32>
    %c0_203 = arith.constant 0 : index
    %c0_204 = arith.constant 0 : index
    %123 = vector.load %arg5[%c0_203, %c0_204] : memref<8x4xf32, #tpu.memory_space<vmem>>, vector<8x4xf32>
    tpu.vector_store %arg5[%c0_203, %c0_204], %122 {strides = array<i32>} : memref<8x4xf32, #tpu.memory_space<vmem>>, vector<8x4xf32>,
    %c0_205 = arith.constant 0 : index
    %c0_206 = arith.constant 0 : index
    %124 = tpu.strided_load %arg5[%c0_205, %c0_206] {strides = array<i32: 2, 1>} : memref<8x4xf32, #tpu.memory_space<vmem>>, vector<4x4xf32>
    %c0_207 = arith.constant 0 : index
    %c0_208 = arith.constant 0 : index
    %c2_209 = arith.constant 2 : index
    %c0_210 = arith.constant 0 : index
    %c16_211 = arith.constant 16 : index
    %125 = vector.load %arg4[%c0_207, %c0_208, %c2_209, %c0_210, %c16_211] : memref<1x1x4x4x32xf32, #tpu.memory_space<vmem>>, vector<1x1x1x4x4xf32>
    %126 = vector.shape_cast %125 : vector<1x1x1x4x4xf32> to vector<4x4xf32>
    %127 = vector.shape_cast %124 : vector<4x4xf32> to vector<1x1x1x4x4xf32>
    tpu.vector_store %arg4[%c0_207, %c0_208, %c2_209, %c0_210, %c16_211], %127 {strides = array<i32>} : memref<1x1x4x4x32xf32, #tpu.memory_space<vmem>>, vector<1x1x1x4x4xf32>,
    %c1_212 = arith.constant 1 : index
    %c0_213 = arith.constant 0 : index
    %128 = tpu.strided_load %arg5[%c1_212, %c0_213] {strides = array<i32: 2, 1>} : memref<8x4xf32, #tpu.memory_space<vmem>>, vector<4x4xf32>
    %c0_214 = arith.constant 0 : index
    %c0_215 = arith.constant 0 : index
    %c2_216 = arith.constant 2 : index
    %c0_217 = arith.constant 0 : index
    %c20_218 = arith.constant 20 : index
    %129 = vector.load %arg4[%c0_214, %c0_215, %c2_216, %c0_217, %c20_218] : memref<1x1x4x4x32xf32, #tpu.memory_space<vmem>>, vector<1x1x1x4x4xf32>
    %130 = vector.shape_cast %129 : vector<1x1x1x4x4xf32> to vector<4x4xf32>
    %131 = vector.shape_cast %128 : vector<4x4xf32> to vector<1x1x1x4x4xf32>
    tpu.vector_store %arg4[%c0_214, %c0_215, %c2_216, %c0_217, %c20_218], %131 {strides = array<i32>} : memref<1x1x4x4x32xf32, #tpu.memory_space<vmem>>, vector<1x1x1x4x4xf32>,
    %c0_219 = arith.constant 0 : index
    %c0_220 = arith.constant 0 : index
    %c1_221 = arith.constant 1 : index
    %c6_222 = arith.constant 6 : index
    %c0_223 = arith.constant 0 : index
    %132 = vector.load %arg3[%c0_219, %c0_220, %c1_221, %c6_222, %c0_223] : memref<1x4x2x8x8xf32, #tpu.memory_space<vmem>>, vector<1x4x1x1x8xf32>
    %133 = vector.shape_cast %132 : vector<1x4x1x1x8xf32> to vector<4x8xf32>
    %134 = tpu.transpose %133, [1, 0] : vector<4x8xf32> -> vector<8x4xf32>
    %c0_224 = arith.constant 0 : index
    %c0_225 = arith.constant 0 : index
    %135 = vector.load %arg5[%c0_224, %c0_225] : memref<8x4xf32, #tpu.memory_space<vmem>>, vector<8x4xf32>
    tpu.vector_store %arg5[%c0_224, %c0_225], %134 {strides = array<i32>} : memref<8x4xf32, #tpu.memory_space<vmem>>, vector<8x4xf32>,
    %c0_226 = arith.constant 0 : index
    %c0_227 = arith.constant 0 : index
    %136 = tpu.strided_load %arg5[%c0_226, %c0_227] {strides = array<i32: 2, 1>} : memref<8x4xf32, #tpu.memory_space<vmem>>, vector<4x4xf32>
    %c0_228 = arith.constant 0 : index
    %c0_229 = arith.constant 0 : index
    %c3_230 = arith.constant 3 : index
    %c0_231 = arith.constant 0 : index
    %c16_232 = arith.constant 16 : index
    %137 = vector.load %arg4[%c0_228, %c0_229, %c3_230, %c0_231, %c16_232] : memref<1x1x4x4x32xf32, #tpu.memory_space<vmem>>, vector<1x1x1x4x4xf32>
    %138 = vector.shape_cast %137 : vector<1x1x1x4x4xf32> to vector<4x4xf32>
    %139 = vector.shape_cast %136 : vector<4x4xf32> to vector<1x1x1x4x4xf32>
    tpu.vector_store %arg4[%c0_228, %c0_229, %c3_230, %c0_231, %c16_232], %139 {strides = array<i32>} : memref<1x1x4x4x32xf32, #tpu.memory_space<vmem>>, vector<1x1x1x4x4xf32>,
    %c1_233 = arith.constant 1 : index
    %c0_234 = arith.constant 0 : index
    %140 = tpu.strided_load %arg5[%c1_233, %c0_234] {strides = array<i32: 2, 1>} : memref<8x4xf32, #tpu.memory_space<vmem>>, vector<4x4xf32>
    %c0_235 = arith.constant 0 : index
    %c0_236 = arith.constant 0 : index
    %c3_237 = arith.constant 3 : index
    %c0_238 = arith.constant 0 : index
    %c20_239 = arith.constant 20 : index
    %141 = vector.load %arg4[%c0_235, %c0_236, %c3_237, %c0_238, %c20_239] : memref<1x1x4x4x32xf32, #tpu.memory_space<vmem>>, vector<1x1x1x4x4xf32>
    %142 = vector.shape_cast %141 : vector<1x1x1x4x4xf32> to vector<4x4xf32>
    %143 = vector.shape_cast %140 : vector<4x4xf32> to vector<1x1x1x4x4xf32>
    tpu.vector_store %arg4[%c0_235, %c0_236, %c3_237, %c0_238, %c20_239], %143 {strides = array<i32>} : memref<1x1x4x4x32xf32, #tpu.memory_space<vmem>>, vector<1x1x1x4x4xf32>,
    %c0_240 = arith.constant 0 : index
    %c0_241 = arith.constant 0 : index
    %c1_242 = arith.constant 1 : index
    %c1_243 = arith.constant 1 : index
    %c0_244 = arith.constant 0 : index
    %144 = vector.load %arg3[%c0_240, %c0_241, %c1_242, %c1_243, %c0_244] : memref<1x4x2x8x8xf32, #tpu.memory_space<vmem>>, vector<1x4x1x1x8xf32>
    %145 = vector.shape_cast %144 : vector<1x4x1x1x8xf32> to vector<4x8xf32>
    %146 = tpu.transpose %145, [1, 0] : vector<4x8xf32> -> vector<8x4xf32>
    %c0_245 = arith.constant 0 : index
    %c0_246 = arith.constant 0 : index
    %147 = vector.load %arg5[%c0_245, %c0_246] : memref<8x4xf32, #tpu.memory_space<vmem>>, vector<8x4xf32>
    tpu.vector_store %arg5[%c0_245, %c0_246], %146 {strides = array<i32>} : memref<8x4xf32, #tpu.memory_space<vmem>>, vector<8x4xf32>,
    %c0_247 = arith.constant 0 : index
    %c0_248 = arith.constant 0 : index
    %148 = tpu.strided_load %arg5[%c0_247, %c0_248] {strides = array<i32: 2, 1>} : memref<8x4xf32, #tpu.memory_space<vmem>>, vector<4x4xf32>
    %c0_249 = arith.constant 0 : index
    %c0_250 = arith.constant 0 : index
    %c0_251 = arith.constant 0 : index
    %c0_252 = arith.constant 0 : index
    %c24 = arith.constant 24 : index
    %149 = vector.load %arg4[%c0_249, %c0_250, %c0_251, %c0_252, %c24] : memref<1x1x4x4x32xf32, #tpu.memory_space<vmem>>, vector<1x1x1x4x4xf32>
    %150 = vector.shape_cast %149 : vector<1x1x1x4x4xf32> to vector<4x4xf32>
    %151 = vector.shape_cast %148 : vector<4x4xf32> to vector<1x1x1x4x4xf32>
    tpu.vector_store %arg4[%c0_249, %c0_250, %c0_251, %c0_252, %c24], %151 {strides = array<i32>} : memref<1x1x4x4x32xf32, #tpu.memory_space<vmem>>, vector<1x1x1x4x4xf32>,
    %c1_253 = arith.constant 1 : index
    %c0_254 = arith.constant 0 : index
    %152 = tpu.strided_load %arg5[%c1_253, %c0_254] {strides = array<i32: 2, 1>} : memref<8x4xf32, #tpu.memory_space<vmem>>, vector<4x4xf32>
    %c0_255 = arith.constant 0 : index
    %c0_256 = arith.constant 0 : index
    %c0_257 = arith.constant 0 : index
    %c0_258 = arith.constant 0 : index
    %c28 = arith.constant 28 : index
    %153 = vector.load %arg4[%c0_255, %c0_256, %c0_257, %c0_258, %c28] : memref<1x1x4x4x32xf32, #tpu.memory_space<vmem>>, vector<1x1x1x4x4xf32>
    %154 = vector.shape_cast %153 : vector<1x1x1x4x4xf32> to vector<4x4xf32>
    %155 = vector.shape_cast %152 : vector<4x4xf32> to vector<1x1x1x4x4xf32>
    tpu.vector_store %arg4[%c0_255, %c0_256, %c0_257, %c0_258, %c28], %155 {strides = array<i32>} : memref<1x1x4x4x32xf32, #tpu.memory_space<vmem>>, vector<1x1x1x4x4xf32>,
    %c0_259 = arith.constant 0 : index
    %c0_260 = arith.constant 0 : index
    %c1_261 = arith.constant 1 : index
    %c3_262 = arith.constant 3 : index
    %c0_263 = arith.constant 0 : index
    %156 = vector.load %arg3[%c0_259, %c0_260, %c1_261, %c3_262, %c0_263] : memref<1x4x2x8x8xf32, #tpu.memory_space<vmem>>, vector<1x4x1x1x8xf32>
    %157 = vector.shape_cast %156 : vector<1x4x1x1x8xf32> to vector<4x8xf32>
    %158 = tpu.transpose %157, [1, 0] : vector<4x8xf32> -> vector<8x4xf32>
    %c0_264 = arith.constant 0 : index
    %c0_265 = arith.constant 0 : index
    %159 = vector.load %arg5[%c0_264, %c0_265] : memref<8x4xf32, #tpu.memory_space<vmem>>, vector<8x4xf32>
    tpu.vector_store %arg5[%c0_264, %c0_265], %158 {strides = array<i32>} : memref<8x4xf32, #tpu.memory_space<vmem>>, vector<8x4xf32>,
    %c0_266 = arith.constant 0 : index
    %c0_267 = arith.constant 0 : index
    %160 = tpu.strided_load %arg5[%c0_266, %c0_267] {strides = array<i32: 2, 1>} : memref<8x4xf32, #tpu.memory_space<vmem>>, vector<4x4xf32>
    %c0_268 = arith.constant 0 : index
    %c0_269 = arith.constant 0 : index
    %c1_270 = arith.constant 1 : index
    %c0_271 = arith.constant 0 : index
    %c24_272 = arith.constant 24 : index
    %161 = vector.load %arg4[%c0_268, %c0_269, %c1_270, %c0_271, %c24_272] : memref<1x1x4x4x32xf32, #tpu.memory_space<vmem>>, vector<1x1x1x4x4xf32>
    %162 = vector.shape_cast %161 : vector<1x1x1x4x4xf32> to vector<4x4xf32>
    %163 = vector.shape_cast %160 : vector<4x4xf32> to vector<1x1x1x4x4xf32>
    tpu.vector_store %arg4[%c0_268, %c0_269, %c1_270, %c0_271, %c24_272], %163 {strides = array<i32>} : memref<1x1x4x4x32xf32, #tpu.memory_space<vmem>>, vector<1x1x1x4x4xf32>,
    %c1_273 = arith.constant 1 : index
    %c0_274 = arith.constant 0 : index
    %164 = tpu.strided_load %arg5[%c1_273, %c0_274] {strides = array<i32: 2, 1>} : memref<8x4xf32, #tpu.memory_space<vmem>>, vector<4x4xf32>
    %c0_275 = arith.constant 0 : index
    %c0_276 = arith.constant 0 : index
    %c1_277 = arith.constant 1 : index
    %c0_278 = arith.constant 0 : index
    %c28_279 = arith.constant 28 : index
    %165 = vector.load %arg4[%c0_275, %c0_276, %c1_277, %c0_278, %c28_279] : memref<1x1x4x4x32xf32, #tpu.memory_space<vmem>>, vector<1x1x1x4x4xf32>
    %166 = vector.shape_cast %165 : vector<1x1x1x4x4xf32> to vector<4x4xf32>
    %167 = vector.shape_cast %164 : vector<4x4xf32> to vector<1x1x1x4x4xf32>
    tpu.vector_store %arg4[%c0_275, %c0_276, %c1_277, %c0_278, %c28_279], %167 {strides = array<i32>} : memref<1x1x4x4x32xf32, #tpu.memory_space<vmem>>, vector<1x1x1x4x4xf32>,
    %c0_280 = arith.constant 0 : index
    %c0_281 = arith.constant 0 : index
    %c1_282 = arith.constant 1 : index
    %c5_283 = arith.constant 5 : index
    %c0_284 = arith.constant 0 : index
    %168 = vector.load %arg3[%c0_280, %c0_281, %c1_282, %c5_283, %c0_284] : memref<1x4x2x8x8xf32, #tpu.memory_space<vmem>>, vector<1x4x1x1x8xf32>
    %169 = vector.shape_cast %168 : vector<1x4x1x1x8xf32> to vector<4x8xf32>
    %170 = tpu.transpose %169, [1, 0] : vector<4x8xf32> -> vector<8x4xf32>
    %c0_285 = arith.constant 0 : index
    %c0_286 = arith.constant 0 : index
    %171 = vector.load %arg5[%c0_285, %c0_286] : memref<8x4xf32, #tpu.memory_space<vmem>>, vector<8x4xf32>
    tpu.vector_store %arg5[%c0_285, %c0_286], %170 {strides = array<i32>} : memref<8x4xf32, #tpu.memory_space<vmem>>, vector<8x4xf32>,
    %c0_287 = arith.constant 0 : index
    %c0_288 = arith.constant 0 : index
    %172 = tpu.strided_load %arg5[%c0_287, %c0_288] {strides = array<i32: 2, 1>} : memref<8x4xf32, #tpu.memory_space<vmem>>, vector<4x4xf32>
    %c0_289 = arith.constant 0 : index
    %c0_290 = arith.constant 0 : index
    %c2_291 = arith.constant 2 : index
    %c0_292 = arith.constant 0 : index
    %c24_293 = arith.constant 24 : index
    %173 = vector.load %arg4[%c0_289, %c0_290, %c2_291, %c0_292, %c24_293] : memref<1x1x4x4x32xf32, #tpu.memory_space<vmem>>, vector<1x1x1x4x4xf32>
    %174 = vector.shape_cast %173 : vector<1x1x1x4x4xf32> to vector<4x4xf32>
    %175 = vector.shape_cast %172 : vector<4x4xf32> to vector<1x1x1x4x4xf32>
    tpu.vector_store %arg4[%c0_289, %c0_290, %c2_291, %c0_292, %c24_293], %175 {strides = array<i32>} : memref<1x1x4x4x32xf32, #tpu.memory_space<vmem>>, vector<1x1x1x4x4xf32>,
    %c1_294 = arith.constant 1 : index
    %c0_295 = arith.constant 0 : index
    %176 = tpu.strided_load %arg5[%c1_294, %c0_295] {strides = array<i32: 2, 1>} : memref<8x4xf32, #tpu.memory_space<vmem>>, vector<4x4xf32>
    %c0_296 = arith.constant 0 : index
    %c0_297 = arith.constant 0 : index
    %c2_298 = arith.constant 2 : index
    %c0_299 = arith.constant 0 : index
    %c28_300 = arith.constant 28 : index
    %177 = vector.load %arg4[%c0_296, %c0_297, %c2_298, %c0_299, %c28_300] : memref<1x1x4x4x32xf32, #tpu.memory_space<vmem>>, vector<1x1x1x4x4xf32>
    %178 = vector.shape_cast %177 : vector<1x1x1x4x4xf32> to vector<4x4xf32>
    %179 = vector.shape_cast %176 : vector<4x4xf32> to vector<1x1x1x4x4xf32>
    tpu.vector_store %arg4[%c0_296, %c0_297, %c2_298, %c0_299, %c28_300], %179 {strides = array<i32>} : memref<1x1x4x4x32xf32, #tpu.memory_space<vmem>>, vector<1x1x1x4x4xf32>,
    %c0_301 = arith.constant 0 : index
    %c0_302 = arith.constant 0 : index
    %c1_303 = arith.constant 1 : index
    %c7_304 = arith.constant 7 : index
    %c0_305 = arith.constant 0 : index
    %180 = vector.load %arg3[%c0_301, %c0_302, %c1_303, %c7_304, %c0_305] : memref<1x4x2x8x8xf32, #tpu.memory_space<vmem>>, vector<1x4x1x1x8xf32>
    %181 = vector.shape_cast %180 : vector<1x4x1x1x8xf32> to vector<4x8xf32>
    %182 = tpu.transpose %181, [1, 0] : vector<4x8xf32> -> vector<8x4xf32>
    %c0_306 = arith.constant 0 : index
    %c0_307 = arith.constant 0 : index
    %183 = vector.load %arg5[%c0_306, %c0_307] : memref<8x4xf32, #tpu.memory_space<vmem>>, vector<8x4xf32>
    tpu.vector_store %arg5[%c0_306, %c0_307], %182 {strides = array<i32>} : memref<8x4xf32, #tpu.memory_space<vmem>>, vector<8x4xf32>,
    %c0_308 = arith.constant 0 : index
    %c0_309 = arith.constant 0 : index
    %184 = tpu.strided_load %arg5[%c0_308, %c0_309] {strides = array<i32: 2, 1>} : memref<8x4xf32, #tpu.memory_space<vmem>>, vector<4x4xf32>
    %c0_310 = arith.constant 0 : index
    %c0_311 = arith.constant 0 : index
    %c3_312 = arith.constant 3 : index
    %c0_313 = arith.constant 0 : index
    %c24_314 = arith.constant 24 : index
    %185 = vector.load %arg4[%c0_310, %c0_311, %c3_312, %c0_313, %c24_314] : memref<1x1x4x4x32xf32, #tpu.memory_space<vmem>>, vector<1x1x1x4x4xf32>
    %186 = vector.shape_cast %185 : vector<1x1x1x4x4xf32> to vector<4x4xf32>
    %187 = vector.shape_cast %184 : vector<4x4xf32> to vector<1x1x1x4x4xf32>
    tpu.vector_store %arg4[%c0_310, %c0_311, %c3_312, %c0_313, %c24_314], %187 {strides = array<i32>} : memref<1x1x4x4x32xf32, #tpu.memory_space<vmem>>, vector<1x1x1x4x4xf32>,
    %c1_315 = arith.constant 1 : index
    %c0_316 = arith.constant 0 : index
    %188 = tpu.strided_load %arg5[%c1_315, %c0_316] {strides = array<i32: 2, 1>} : memref<8x4xf32, #tpu.memory_space<vmem>>, vector<4x4xf32>
    %c0_317 = arith.constant 0 : index
    %c0_318 = arith.constant 0 : index
    %c3_319 = arith.constant 3 : index
    %c0_320 = arith.constant 0 : index
    %c28_321 = arith.constant 28 : index
    %189 = vector.load %arg4[%c0_317, %c0_318, %c3_319, %c0_320, %c28_321] : memref<1x1x4x4x32xf32, #tpu.memory_space<vmem>>, vector<1x1x1x4x4xf32>
    %190 = vector.shape_cast %189 : vector<1x1x1x4x4xf32> to vector<4x4xf32>
    %191 = vector.shape_cast %188 : vector<4x4xf32> to vector<1x1x1x4x4xf32>
    tpu.vector_store %arg4[%c0_317, %c0_318, %c3_319, %c0_320, %c28_321], %191 {strides = array<i32>} : memref<1x1x4x4x32xf32, #tpu.memory_space<vmem>>, vector<1x1x1x4x4xf32>,
    return
  }
  func.func @transform_0(%arg0: i32, %arg1: i32, %arg2: i32) -> (i32, i32, i32, i32, i32) {
    %c0_i32 = arith.constant 0 : i32
    %c0_i32_0 = arith.constant 0 : i32
    %c0_i32_1 = arith.constant 0 : i32
    return %arg0, %c0_i32, %arg1, %arg2, %c0_i32_0 : i32, i32, i32, i32, i32
  }
  func.func @transform_1(%arg0: i32, %arg1: i32, %arg2: i32) -> (i32, i32, i32, i32, i32) {
    %c0_i32 = arith.constant 0 : i32
    %c0_i32_0 = arith.constant 0 : i32
    %c0_i32_1 = arith.constant 0 : i32
    return %arg0, %arg1, %arg2, %c0_i32, %c0_i32_0 : i32, i32, i32, i32, i32
  }
}

</mosaic_0001>

<llo_original>
// kernel: tpu_custom_call.1
$region0: #{tpu_custom_call.1}
  #allocation0 [shape = 'u32[]', space=smem, size = 0x4, offset = 0x4, fixed_abs, tag = 'smem constant byte address 0x4 - core index']
  #allocation1 [shape = 'u32[144,128]{1,0:T(1,128)}', space=vmem, size = 0x12000, scoped, tag = 'internal scratch']
  #allocation2 [shape = 'f32[8,4]{1,0:T(8,128)}', space=vmem, size = 0x1000, scoped, tag = 'scratch operand']
  #allocation7 [shape = 's32[]', space=sflag, size = 0x4, offset = 0, fixed_abs, tag = 'sflag constant byte address 0x0 - dummy sync flag']
  %s0 = inlined_call_operand.hbm [shape: f32[2,4,4,8,8], index: 0, kind: input, shape index: {}]
  %s1 = inlined_call_operand.hbm [shape: f32[2,2,4,4,32], index: 1, kind: output, shape index: {}]
  %s2 = sld [smem:[#allocation0]]
  $region41: #{tpu_custom_call.1} parent=0
    _
  %s4 = ssub.s32 1, %s2
  %s5 = scalar_select 0, %s4, %s2
  $region1: #{tpu_custom_call.1} parent=0
    #allocation3 [shape = 'u8[65536]{0}', space=vmem, size = 0x10000, scoped, tag = 'input window, operand 0']
    #allocation4 [shape = 's32[2]{0}', space=sflag, size = 0x8, scoped, tag = 'scoped memory for tpu_custom_call.1']
    #allocation5 [shape = 's32[2]{0}', space=sflag, size = 0x8, scoped, tag = 'scoped memory for tpu_custom_call.1']
    #allocation6 [shape = 'u8[16384]{0}', space=vmem, size = 0x4000, scoped, tag = 'output window, operand 0']
    %6 = vsyncpa [#allocation4], 0
    %s7 = scalar_lea.sflag [#allocation4], 1
    %8 = vsyncpa %s7, 0
    %9 = vsyncpa [#allocation5], 0
    %s10 = scalar_lea.sflag [#allocation5], 1
    %11 = vsyncpa %s10, 0
    loop: start=0, step=1, limit=6
    $region2: #{tpu_custom_call.1} parent=1 // loop_pre_header
      _
    $region3: #{tpu_custom_call.1} parent=1 // loop_header
      %s13 = sphi 0, %s17
      %p14 = scmp.ge.s32.totalorder %s13, 6
      %s20 = sphi 0, %s39
      %s21 = sphi 0, %s35
      %s22 = sphi 0, %s31
      %s23 = sphi 0, %s20
      %s24 = sphi 0, %s21
      %s25 = sphi 0, %s22
      %s26 = sphi 0, %s23
      %s27 = sphi 0, %s24
      %s28 = sphi 0, %s25
      %s46 = sphi 0, %s48
      %s49 = sphi 0, %s46
      %s50 = sphi 0, %s49
      %s66 = sphi 0, %s50
      %s76 = sphi 0, %s78
      %s79 = sphi 0, %s76
      %s80 = sphi 0, %s79
      %s96 = sphi 0, %s80
    $region4: #{tpu_custom_call.1} parent=1 // loop_header_branch
      %16 = sbr.rel (%p14) target = $region8
    $region5: #{tpu_custom_call.1} parent=1 // loop_body
      %s18 = ssub.s32 %s13, 1
      %s19 = ssub.s32 %s13, 2
      %s29 = sadd.s32 1, %s22
      %p30 = scmp.ge.s32.totalorder %s29, 1
      %s31 = scalar_select %p30, 0, %s29
      %s32 = sadd.s32 1, %s21
      %s33 = scalar_select %p30, %s32, %s21
      %p34 = scmp.ge.s32.totalorder %s33, 2
      %s35 = scalar_select %p34, 0, %s33
      %s36 = sadd.s32 1, %s20
      %s37 = scalar_select %p34, %s36, %s20
      %p38 = scmp.ge.s32.totalorder %s37, 2
      %s39 = scalar_select %p38, 0, %s37
      %s40 = ssub.s32 %s20, %s39
      %s41 = ssub.s32 %s21, %s35
      %s42 = sor.u32 %s40, %s41
      %s43 = ssub.s32 %s22, %s31
      %s44 = sor.u32 %s42, %s43
      %p45 = scmp.eq.s32.totalorder %s44, 0
      %s47 = sadd.s32 %s46, 1
      %s48 = scalar_select %p45, %s46, %s47
      %p51 = pneg %p45
      %p52 = scmp.eq.s32.totalorder %s13, 3
      %p53 = por %p51, %p52
      %p54 = scmp.ne.s32.totalorder %s46, %s49
      %p55 = scmp.eq.s32.totalorder %s13, 0
      %p56 = por %p54, %p55
      %p57 = scmp.ne.s32.totalorder %s46, %s49
      %p58 = scmp.eq.s32.totalorder %s18, 3
      %p59 = por %p57, %p58
      %p60 = scmp.ne.s32.totalorder %s49, %s50
      %p61 = scmp.eq.s32.totalorder %s18, 0
      %p62 = por %p60, %p61
      %p63 = scmp.ne.s32.totalorder %s49, %s50
      %p64 = scmp.eq.s32.totalorder %s19, 3
      %p65 = por %p63, %p64
      %p67 = scmp.ne.s32.totalorder %s50, %s66
      %p68 = scmp.eq.s32.totalorder %s19, 0
      %p69 = por %p67, %p68
      %s70 = ssub.s32 %s20, %s39
      %s71 = ssub.s32 %s21, %s35
      %s72 = sor.u32 %s70, %s71
      %s73 = ssub.s32 %s22, %s31
      %s74 = sor.u32 %s72, %s73
      %p75 = scmp.eq.s32.totalorder %s74, 0
      %s77 = sadd.s32 %s76, 1
      %s78 = scalar_select %p75, %s76, %s77
      %p81 = pneg %p75
      %p82 = scmp.eq.s32.totalorder %s13, 3
      %p83 = por %p81, %p82
      %p84 = scmp.ne.s32.totalorder %s76, %s79
      %p85 = scmp.eq.s32.totalorder %s13, 0
      %p86 = por %p84, %p85
      %p87 = scmp.ne.s32.totalorder %s76, %s79
      %p88 = scmp.eq.s32.totalorder %s18, 3
      %p89 = por %p87, %p88
      %p90 = scmp.ne.s32.totalorder %s79, %s80
      %p91 = scmp.eq.s32.totalorder %s18, 0
      %p92 = por %p90, %p91
      %p93 = scmp.ne.s32.totalorder %s79, %s80
      %p94 = scmp.eq.s32.totalorder %s19, 3
      %p95 = por %p93, %p94
      %p97 = scmp.ne.s32.totalorder %s80, %s96
      %p98 = scmp.eq.s32.totalorder %s19, 0
      %p99 = por %p97, %p98
      %p100 = scmp.le.s32.totalorder 1, %s13
      %p101 = scmp.lt.s32.totalorder %s13, 5
      %p102 = pnand %p100, %p101
      %p103 = pneg %p102
      // Predicated region
      $region9: #{tpu_custom_call.1} parent=5 // pred_check
        _
      $region10: #{tpu_custom_call.1} parent=5 // pred_check_branch
        %105 = sbr.rel (%p102) target = $region12
      $region11: #{tpu_custom_call.1} parent=5 // pred_region
        %s106 = ssub.s32 %s13, 1
      $region12: #{tpu_custom_call.1} parent=5 // pred_fallthru
        _
      %p107 = scmp.lt.s32.totalorder %s13, 4
      // Predicated region
      $region13: #{tpu_custom_call.1} parent=5 // pred_check
        %p108 = pneg %p107
      $region14: #{tpu_custom_call.1} parent=5 // pred_check_branch
        %110 = sbr.rel (%p108) target = $region16
      $region15: #{tpu_custom_call.1} parent=5 // pred_region
        // Predicated region
        $region17: #{tpu_custom_call.1} parent=15 // pred_check
          %p111 = pneg %p56
        $region18: #{tpu_custom_call.1} parent=15 // pred_check_branch
          %113 = sbr.rel (%p111) target = $region20
        $region19: #{tpu_custom_call.1} parent=15 // pred_region
          #allocation8 [shape = 'u32[6]{0}', space=smem, size = 0x18, scoped, tag = 'DMA stride descriptor']
          %s114 = sand.u32 %s46, 1
          %s115 = scalar_lea.sflag [#allocation4], %s114
          %s116 = sand.u32 %s46, 1
          %s117 = smul.addr %s116, 64
          %s118 = scalar_lea.vmem [#allocation3], %s117
          %s119 = smul.u32 2, %s21
          %s121 = ssub.s32 1024, 1024
          %122 = vsyncadd %s115, %s121
          %s123 = sadd.s32 %s22, %s119
          %s124 = smul.addr %s20, 16
          %s125 = sadd.s32 %s123, %s124
          %s126 = smul.addr %s125, 128
          %s127 = scalar_lea.hbm %s0, %s126
          %s129 = sshll.u32 1, 14
          %s130 = sxor.u32 4294967295, %s129
          %s132 = sld [smem:[#allocation0]]
          %s133 = sadd.s32 2, %s132
          %s135 = sshll.u32 7, 26
          %s136 = sxor.u32 4294967295, %s135
          %s137 = sand.u32 0, %s136
          %s138 = sshll.u32 %s133, 26
          %s139 = sor.u32 %s137, %s138
          %s140 = sshll.u32 %s118, 4
          %s141 = int_to_ptr.vmem [resolvable:$true] %s140
          %147 = sst [smem:[#allocation8]] 512
          %s148 = scalar_lea.smem [#allocation8], 1
          %149 = sst [smem:[%s148]] 256
          %s150 = scalar_lea.smem [#allocation8], 2
          %151 = sst [smem:[%s150]] 2
          %s152 = scalar_lea.smem [#allocation8], 3
          %153 = sst [smem:[%s152]] 128
          %s154 = scalar_lea.smem [#allocation8], 4
          %155 = sst [smem:[%s154]] 128
          %s156 = scalar_lea.smem [#allocation8], 5
          %157 = sst [smem:[%s156]] 8
          %159 = dma.general %s127, 1024, %s141, %s115, [#allocation7], [#allocation8], %s139, 0
        $region20: #{tpu_custom_call.1} parent=15 // pred_fallthru
          _
      $region16: #{tpu_custom_call.1} parent=5 // pred_fallthru
        _
      %p160 = scmp.le.s32.totalorder 1, %s13
      %p161 = scmp.lt.s32.totalorder %s13, 5
      %p162 = pnand %p160, %p161
      %p163 = pneg %p162
      // Predicated region
      $region21: #{tpu_custom_call.1} parent=5 // pred_check
        _
      $region22: #{tpu_custom_call.1} parent=5 // pred_check_branch
        %165 = sbr.rel (%p162) target = $region24
      $region23: #{tpu_custom_call.1} parent=5 // pred_region
        %s166 = ssub.s32 %s13, 1
        %s167 = sand.u32 %s49, 1
        %s168 = scalar_lea.sflag [#allocation4], %s167
        %s169 = sand.u32 %s49, 1
        %s170 = smul.addr %s169, 64
        %s171 = scalar_lea.vmem [#allocation3], %s170
        // Predicated region
        $region25: #{tpu_custom_call.1} parent=23 // pred_check
          %p172 = pneg %p62
        $region26: #{tpu_custom_call.1} parent=23 // pred_check_branch
          %174 = sbr.rel (%p172) target = $region28
        $region27: #{tpu_custom_call.1} parent=23 // pred_region
          %175 = dma.done %s168, 1024
        $region28: #{tpu_custom_call.1} parent=23 // pred_fallthru
          _
        %s176 = sand.u32 %s49, 1
        %s177 = scalar_lea.sflag [#allocation4], %s176
        %s178 = sand.u32 %s49, 1
        %s179 = smul.addr %s178, 64
        %s180 = scalar_lea.vmem [#allocation3], %s179
        %p181 = pneg %p62
        %p182 = pneg %p59
        %p183 = pneg %p92
        %p184 = pneg %p89
        %s185 = sand.u32 %s79, 1
        %s186 = scalar_lea.sflag [#allocation5], %s185
        %s187 = sand.u32 %s79, 1
        %s188 = smul.addr %s187, 16
        %s189 = scalar_lea.vmem [#allocation6], %s188
        %s190 = smul.u32 2, %s24
        %s191 = smul.u32 4, %s25
        %v192 = vld [vmem:[%s171] sm:$0x1]
        %v193 = vld [vmem:[%s171 + $0x10] sm:$0x1]
        %v194 = vld [vmem:[%s171 + $0x20] sm:$0x1]
        %v195 = vld [vmem:[%s171 + $0x30] sm:$0x1]
        %v200 = vrot.slane %v193, 7
        %vm201 = vcmask 1041409
        %v202 = vsel %vm201, %v200, %v192
        %v203 = vrot.slane %v194, 6
        %vm204 = vcmask 1042434
        %v205 = vsel %vm204, %v203, %v202
        %v206 = vrot.slane %v195, 5
        %vm207 = vcmask 1043459
        %v208 = vsel %vm207, %v206, %v205
        %210 = vxpose.xlu0.b32.start [1/16] %v208, 128
        %211 = vxpose.xlu0.b32.cont [2/16] 0.0, 128
        %212 = vxpose.xlu0.b32.cont [3/16] 0.0, 128
        %213 = vxpose.xlu0.b32.cont [4/16] 0.0, 128
        %214 = vxpose.xlu0.b32.cont [5/16] 0.0, 128
        %215 = vxpose.xlu0.b32.cont [6/16] 0.0, 128
        %216 = vxpose.xlu0.b32.cont [7/16] 0.0, 128
        %217 = vxpose.xlu0.b32.cont [8/16] 0.0, 128
        %218 = vxpose.xlu0.b32.cont [9/16] 0.0, 128
        %219 = vxpose.xlu0.b32.cont [10/16] 0.0, 128
        %220 = vxpose.xlu0.b32.cont [11/16] 0.0, 128
        %221 = vxpose.xlu0.b32.cont [12/16] 0.0, 128
        %222 = vxpose.xlu0.b32.cont [13/16] 0.0, 128
        %223 = vxpose.xlu0.b32.cont [14/16] 0.0, 128
        %224 = vxpose.xlu0.b32.cont [15/16] 0.0, 128
        %225 = vxpose.xlu0.b32.end [16/16] 0.0, 128
        %v226 = vpop.trf.xlu0
        %v227 = vpop.trf.xlu0
        %v228 = vpop.trf.xlu0
        %v229 = vpop.trf.xlu0
        %v230 = vpop.trf.xlu0
        %v231 = vpop.trf.xlu0
        %v232 = vpop.trf.xlu0
        %v233 = vpop.trf.xlu0
        %v234 = vpop.trf.xlu0
        %v235 = vpop.trf.xlu0
        %v236 = vpop.trf.xlu0
        %v237 = vpop.trf.xlu0
        %v238 = vpop.trf.xlu0
        %v239 = vpop.trf.xlu0
        %v240 = vpop.trf.xlu0
        %v241 = vpop.trf.xlu0
        %vm242 = vcmask 31744
        %243 = vst.msk [vmem:[#allocation2] sm:$0xff] %vm242, %v226
        %v244 = vld [vmem:[#allocation2] ss:$2 sm:$0xf]
        %vm245 = vcmask 27648
        %246 = vst.msk [vmem:[%s189] sm:$0xf] %vm245, %v244
        %s247 = scalar_lea.vmem [#allocation2], 1
        %v248 = vld [vmem:[%s247] ss:$2 sm:$0xf]
        %250 = vrot.lane.b32.xlu0 %v248, 4
        %v251 = vpop.permute.xlu0 %250
        %vm253 = vcmask 60448
        %254 = vst.msk [vmem:[%s189] sm:$0xf] %vm253, %v251
        %v255 = vld [vmem:[%s171 + $0x2] sm:$0x1]
        %v256 = vld [vmem:[%s171 + $0x12] sm:$0x1]
        %v257 = vld [vmem:[%s171 + $0x22] sm:$0x1]
        %v258 = vld [vmem:[%s171 + $0x32] sm:$0x1]
        %v263 = vrot.slane %v256, 7
        %v264 = vsel %vm201, %v263, %v255
        %v265 = vrot.slane %v257, 6
        %v266 = vsel %vm204, %v265, %v264
        %v267 = vrot.slane %v258, 5
        %v268 = vsel %vm207, %v267, %v266
        %270 = vxpose.xlu0.b32.start [1/16] %v268, 128
        %271 = vxpose.xlu0.b32.cont [2/16] 0.0, 128
        %272 = vxpose.xlu0.b32.cont [3/16] 0.0, 128
        %273 = vxpose.xlu0.b32.cont [4/16] 0.0, 128
        %274 = vxpose.xlu0.b32.cont [5/16] 0.0, 128
        %275 = vxpose.xlu0.b32.cont [6/16] 0.0, 128
        %276 = vxpose.xlu0.b32.cont [7/16] 0.0, 128
        %277 = vxpose.xlu0.b32.cont [8/16] 0.0, 128
        %278 = vxpose.xlu0.b32.cont [9/16] 0.0, 128
        %279 = vxpose.xlu0.b32.cont [10/16] 0.0, 128
        %280 = vxpose.xlu0.b32.cont [11/16] 0.0, 128
        %281 = vxpose.xlu0.b32.cont [12/16] 0.0, 128
        %282 = vxpose.xlu0.b32.cont [13/16] 0.0, 128
        %283 = vxpose.xlu0.b32.cont [14/16] 0.0, 128
        %284 = vxpose.xlu0.b32.cont [15/16] 0.0, 128
        %285 = vxpose.xlu0.b32.end [16/16] 0.0, 128
        %v286 = vpop.trf.xlu0
        %v287 = vpop.trf.xlu0
        %v288 = vpop.trf.xlu0
        %v289 = vpop.trf.xlu0
        %v290 = vpop.trf.xlu0
        %v291 = vpop.trf.xlu0
        %v292 = vpop.trf.xlu0
        %v293 = vpop.trf.xlu0
        %v294 = vpop.trf.xlu0
        %v295 = vpop.trf.xlu0
        %v296 = vpop.trf.xlu0
        %v297 = vpop.trf.xlu0
        %v298 = vpop.trf.xlu0
        %v299 = vpop.trf.xlu0
        %v300 = vpop.trf.xlu0
        %v301 = vpop.trf.xlu0
        %302 = vst.msk [vmem:[#allocation2] sm:$0xff] %vm242, %v286
        %v303 = vld [vmem:[#allocation2] ss:$2 sm:$0xf]
        %s304 = scalar_lea.vmem %s189, 4 [#allocation6]
        %305 = vst.msk [vmem:[%s304] sm:$0xf] %vm245, %v303
        %v306 = vld [vmem:[%s247] ss:$2 sm:$0xf]
        %308 = vrot.lane.b32.xlu0 %v306, 4
        %v309 = vpop.permute.xlu0 %308
        %311 = vst.msk [vmem:[%s304] sm:$0xf] %vm253, %v309
        %v312 = vld [vmem:[%s171 + $0x4] sm:$0x1]
        %v313 = vld [vmem:[%s171 + $0x14] sm:$0x1]
        %v314 = vld [vmem:[%s171 + $0x24] sm:$0x1]
        %v315 = vld [vmem:[%s171 + $0x34] sm:$0x1]
        %v320 = vrot.slane %v313, 7
        %v321 = vsel %vm201, %v320, %v312
        %v322 = vrot.slane %v314, 6
        %v323 = vsel %vm204, %v322, %v321
        %v324 = vrot.slane %v315, 5
        %v325 = vsel %vm207, %v324, %v323
        %327 = vxpose.xlu0.b32.start [1/16] %v325, 128
        %328 = vxpose.xlu0.b32.cont [2/16] 0.0, 128
        %329 = vxpose.xlu0.b32.cont [3/16] 0.0, 128
        %330 = vxpose.xlu0.b32.cont [4/16] 0.0, 128
        %331 = vxpose.xlu0.b32.cont [5/16] 0.0, 128
        %332 = vxpose.xlu0.b32.cont [6/16] 0.0, 128
        %333 = vxpose.xlu0.b32.cont [7/16] 0.0, 128
        %334 = vxpose.xlu0.b32.cont [8/16] 0.0, 128
        %335 = vxpose.xlu0.b32.cont [9/16] 0.0, 128
        %336 = vxpose.xlu0.b32.cont [10/16] 0.0, 128
        %337 = vxpose.xlu0.b32.cont [11/16] 0.0, 128
        %338 = vxpose.xlu0.b32.cont [12/16] 0.0, 128
        %339 = vxpose.xlu0.b32.cont [13/16] 0.0, 128
        %340 = vxpose.xlu0.b32.cont [14/16] 0.0, 128
        %341 = vxpose.xlu0.b32.cont [15/16] 0.0, 128
        %342 = vxpose.xlu0.b32.end [16/16] 0.0, 128
        %v343 = vpop.trf.xlu0
        %v344 = vpop.trf.xlu0
        %v345 = vpop.trf.xlu0
        %v346 = vpop.trf.xlu0
        %v347 = vpop.trf.xlu0
        %v348 = vpop.trf.xlu0
        %v349 = vpop.trf.xlu0
        %v350 = vpop.trf.xlu0
        %v351 = vpop.trf.xlu0
        %v352 = vpop.trf.xlu0
        %v353 = vpop.trf.xlu0
        %v354 = vpop.trf.xlu0
        %v355 = vpop.trf.xlu0
        %v356 = vpop.trf.xlu0
        %v357 = vpop.trf.xlu0
        %v358 = vpop.trf.xlu0
        %359 = vst.msk [vmem:[#allocation2] sm:$0xff] %vm242, %v343
        %v360 = vld [vmem:[#allocation2] ss:$2 sm:$0xf]
        %s361 = scalar_lea.vmem %s189, 8 [#allocation6]
        %362 = vst.msk [vmem:[%s361] sm:$0xf] %vm245, %v360
        %v363 = vld [vmem:[%s247] ss:$2 sm:$0xf]
        %365 = vrot.lane.b32.xlu0 %v363, 4
        %v366 = vpop.permute.xlu0 %365
        %368 = vst.msk [vmem:[%s361] sm:$0xf] %vm253, %v366
        %v369 = vld [vmem:[%s171 + $0x6] sm:$0x1]
        %v370 = vld [vmem:[%s171 + $0x16] sm:$0x1]
        %v371 = vld [vmem:[%s171 + $0x26] sm:$0x1]
        %v372 = vld [vmem:[%s171 + $0x36] sm:$0x1]
        %v377 = vrot.slane %v370, 7
        %v378 = vsel %vm201, %v377, %v369
        %v379 = vrot.slane %v371, 6
        %v380 = vsel %vm204, %v379, %v378
        %v381 = vrot.slane %v372, 5
        %v382 = vsel %vm207, %v381, %v380
        %384 = vxpose.xlu0.b32.start [1/16] %v382, 128
        %385 = vxpose.xlu0.b32.cont [2/16] 0.0, 128
        %386 = vxpose.xlu0.b32.cont [3/16] 0.0, 128
        %387 = vxpose.xlu0.b32.cont [4/16] 0.0, 128
        %388 = vxpose.xlu0.b32.cont [5/16] 0.0, 128
        %389 = vxpose.xlu0.b32.cont [6/16] 0.0, 128
        %390 = vxpose.xlu0.b32.cont [7/16] 0.0, 128
        %391 = vxpose.xlu0.b32.cont [8/16] 0.0, 128
        %392 = vxpose.xlu0.b32.cont [9/16] 0.0, 128
        %393 = vxpose.xlu0.b32.cont [10/16] 0.0, 128
        %394 = vxpose.xlu0.b32.cont [11/16] 0.0, 128
        %395 = vxpose.xlu0.b32.cont [12/16] 0.0, 128
        %396 = vxpose.xlu0.b32.cont [13/16] 0.0, 128
        %397 = vxpose.xlu0.b32.cont [14/16] 0.0, 128
        %398 = vxpose.xlu0.b32.cont [15/16] 0.0, 128
        %399 = vxpose.xlu0.b32.end [16/16] 0.0, 128
        %v400 = vpop.trf.xlu0
        %v401 = vpop.trf.xlu0
        %v402 = vpop.trf.xlu0
        %v403 = vpop.trf.xlu0
        %v404 = vpop.trf.xlu0
        %v405 = vpop.trf.xlu0
        %v406 = vpop.trf.xlu0
        %v407 = vpop.trf.xlu0
        %v408 = vpop.trf.xlu0
        %v409 = vpop.trf.xlu0
        %v410 = vpop.trf.xlu0
        %v411 = vpop.trf.xlu0
        %v412 = vpop.trf.xlu0
        %v413 = vpop.trf.xlu0
        %v414 = vpop.trf.xlu0
        %v415 = vpop.trf.xlu0
        %416 = vst.msk [vmem:[#allocation2] sm:$0xff] %vm242, %v400
        %v417 = vld [vmem:[#allocation2] ss:$2 sm:$0xf]
        %s418 = scalar_lea.vmem %s189, 12 [#allocation6]
        %419 = vst.msk [vmem:[%s418] sm:$0xf] %vm245, %v417
        %v420 = vld [vmem:[%s247] ss:$2 sm:$0xf]
        %422 = vrot.lane.b32.xlu0 %v420, 4
        %v423 = vpop.permute.xlu0 %422
        %425 = vst.msk [vmem:[%s418] sm:$0xf] %vm253, %v423
        %v426 = vld [vmem:[%s171 + $0x1] sm:$0x1]
        %v427 = vld [vmem:[%s171 + $0x11] sm:$0x1]
        %v428 = vld [vmem:[%s171 + $0x21] sm:$0x1]
        %v429 = vld [vmem:[%s171 + $0x31] sm:$0x1]
        %v434 = vrot.slane %v427, 7
        %v435 = vsel %vm201, %v434, %v426
        %v436 = vrot.slane %v428, 6
        %v437 = vsel %vm204, %v436, %v435
        %v438 = vrot.slane %v429, 5
        %v439 = vsel %vm207, %v438, %v437
        %441 = vxpose.xlu0.b32.start [1/16] %v439, 128
        %442 = vxpose.xlu0.b32.cont [2/16] 0.0, 128
        %443 = vxpose.xlu0.b32.cont [3/16] 0.0, 128
        %444 = vxpose.xlu0.b32.cont [4/16] 0.0, 128
        %445 = vxpose.xlu0.b32.cont [5/16] 0.0, 128
        %446 = vxpose.xlu0.b32.cont [6/16] 0.0, 128
        %447 = vxpose.xlu0.b32.cont [7/16] 0.0, 128
        %448 = vxpose.xlu0.b32.cont [8/16] 0.0, 128
        %449 = vxpose.xlu0.b32.cont [9/16] 0.0, 128
        %450 = vxpose.xlu0.b32.cont [10/16] 0.0, 128
        %451 = vxpose.xlu0.b32.cont [11/16] 0.0, 128
        %452 = vxpose.xlu0.b32.cont [12/16] 0.0, 128
        %453 = vxpose.xlu0.b32.cont [13/16] 0.0, 128
        %454 = vxpose.xlu0.b32.cont [14/16] 0.0, 128
        %455 = vxpose.xlu0.b32.cont [15/16] 0.0, 128
        %456 = vxpose.xlu0.b32.end [16/16] 0.0, 128
        %v457 = vpop.trf.xlu0
        %v458 = vpop.trf.xlu0
        %v459 = vpop.trf.xlu0
        %v460 = vpop.trf.xlu0
        %v461 = vpop.trf.xlu0
        %v462 = vpop.trf.xlu0
        %v463 = vpop.trf.xlu0
        %v464 = vpop.trf.xlu0
        %v465 = vpop.trf.xlu0
        %v466 = vpop.trf.xlu0
        %v467 = vpop.trf.xlu0
        %v468 = vpop.trf.xlu0
        %v469 = vpop.trf.xlu0
        %v470 = vpop.trf.xlu0
        %v471 = vpop.trf.xlu0
        %v472 = vpop.trf.xlu0
        %473 = vst.msk [vmem:[#allocation2] sm:$0xff] %vm242, %v457
        %v474 = vld [vmem:[#allocation2] ss:$2 sm:$0xf]
        %476 = vrot.lane.b32.xlu0 %v474, 8
        %v477 = vpop.permute.xlu0 %476
        %vm479 = vcmask 93248
        %480 = vst.msk [vmem:[%s189] sm:$0xf] %vm479, %v477
        %v481 = vld [vmem:[%s247] ss:$2 sm:$0xf]
        %483 = vrot.lane.b32.xlu0 %v481, 12
        %v484 = vpop.permute.xlu0 %483
        %vm486 = vcmask 126048
        %487 = vst.msk [vmem:[%s189] sm:$0xf] %vm486, %v484
        %v488 = vld [vmem:[%s171 + $0x3] sm:$0x1]
        %v489 = vld [vmem:[%s171 + $0x13] sm:$0x1]
        %v490 = vld [vmem:[%s171 + $0x23] sm:$0x1]
        %v491 = vld [vmem:[%s171 + $0x33] sm:$0x1]
        %v496 = vrot.slane %v489, 7
        %v497 = vsel %vm201, %v496, %v488
        %v498 = vrot.slane %v490, 6
        %v499 = vsel %vm204, %v498, %v497
        %v500 = vrot.slane %v491, 5
        %v501 = vsel %vm207, %v500, %v499
        %503 = vxpose.xlu0.b32.start [1/16] %v501, 128
        %504 = vxpose.xlu0.b32.cont [2/16] 0.0, 128
        %505 = vxpose.xlu0.b32.cont [3/16] 0.0, 128
        %506 = vxpose.xlu0.b32.cont [4/16] 0.0, 128
        %507 = vxpose.xlu0.b32.cont [5/16] 0.0, 128
        %508 = vxpose.xlu0.b32.cont [6/16] 0.0, 128
        %509 = vxpose.xlu0.b32.cont [7/16] 0.0, 128
        %510 = vxpose.xlu0.b32.cont [8/16] 0.0, 128
        %511 = vxpose.xlu0.b32.cont [9/16] 0.0, 128
        %512 = vxpose.xlu0.b32.cont [10/16] 0.0, 128
        %513 = vxpose.xlu0.b32.cont [11/16] 0.0, 128
        %514 = vxpose.xlu0.b32.cont [12/16] 0.0, 128
        %515 = vxpose.xlu0.b32.cont [13/16] 0.0, 128
        %516 = vxpose.xlu0.b32.cont [14/16] 0.0, 128
        %517 = vxpose.xlu0.b32.cont [15/16] 0.0, 128
        %518 = vxpose.xlu0.b32.end [16/16] 0.0, 128
        %v519 = vpop.trf.xlu0
        %v520 = vpop.trf.xlu0
        %v521 = vpop.trf.xlu0
        %v522 = vpop.trf.xlu0
        %v523 = vpop.trf.xlu0
        %v524 = vpop.trf.xlu0
        %v525 = vpop.trf.xlu0
        %v526 = vpop.trf.xlu0
        %v527 = vpop.trf.xlu0
        %v528 = vpop.trf.xlu0
        %v529 = vpop.trf.xlu0
        %v530 = vpop.trf.xlu0
        %v531 = vpop.trf.xlu0
        %v532 = vpop.trf.xlu0
        %v533 = vpop.trf.xlu0
        %v534 = vpop.trf.xlu0
        %535 = vst.msk [vmem:[#allocation2] sm:$0xff] %vm242, %v519
        %v536 = vld [vmem:[#allocation2] ss:$2 sm:$0xf]
        %538 = vrot.lane.b32.xlu0 %v536, 8
        %v539 = vpop.permute.xlu0 %538
        %541 = vst.msk [vmem:[%s304] sm:$0xf] %vm479, %v539
        %v542 = vld [vmem:[%s247] ss:$2 sm:$0xf]
        %544 = vrot.lane.b32.xlu0 %v542, 12
        %v545 = vpop.permute.xlu0 %544
        %547 = vst.msk [vmem:[%s304] sm:$0xf] %vm486, %v545
        %v548 = vld [vmem:[%s171 + $0x5] sm:$0x1]
        %v549 = vld [vmem:[%s171 + $0x15] sm:$0x1]
        %v550 = vld [vmem:[%s171 + $0x25] sm:$0x1]
        %v551 = vld [vmem:[%s171 + $0x35] sm:$0x1]
        %v556 = vrot.slane %v549, 7
        %v557 = vsel %vm201, %v556, %v548
        %v558 = vrot.slane %v550, 6
        %v559 = vsel %vm204, %v558, %v557
        %v560 = vrot.slane %v551, 5
        %v561 = vsel %vm207, %v560, %v559
        %563 = vxpose.xlu0.b32.start [1/16] %v561, 128
        %564 = vxpose.xlu0.b32.cont [2/16] 0.0, 128
        %565 = vxpose.xlu0.b32.cont [3/16] 0.0, 128
        %566 = vxpose.xlu0.b32.cont [4/16] 0.0, 128
        %567 = vxpose.xlu0.b32.cont [5/16] 0.0, 128
        %568 = vxpose.xlu0.b32.cont [6/16] 0.0, 128
        %569 = vxpose.xlu0.b32.cont [7/16] 0.0, 128
        %570 = vxpose.xlu0.b32.cont [8/16] 0.0, 128
        %571 = vxpose.xlu0.b32.cont [9/16] 0.0, 128
        %572 = vxpose.xlu0.b32.cont [10/16] 0.0, 128
        %573 = vxpose.xlu0.b32.cont [11/16] 0.0, 128
        %574 = vxpose.xlu0.b32.cont [12/16] 0.0, 128
        %575 = vxpose.xlu0.b32.cont [13/16] 0.0, 128
        %576 = vxpose.xlu0.b32.cont [14/16] 0.0, 128
        %577 = vxpose.xlu0.b32.cont [15/16] 0.0, 128
        %578 = vxpose.xlu0.b32.end [16/16] 0.0, 128
        %v579 = vpop.trf.xlu0
        %v580 = vpop.trf.xlu0
        %v581 = vpop.trf.xlu0
        %v582 = vpop.trf.xlu0
        %v583 = vpop.trf.xlu0
        %v584 = vpop.trf.xlu0
        %v585 = vpop.trf.xlu0
        %v586 = vpop.trf.xlu0
        %v587 = vpop.trf.xlu0
        %v588 = vpop.trf.xlu0
        %v589 = vpop.trf.xlu0
        %v590 = vpop.trf.xlu0
        %v591 = vpop.trf.xlu0
        %v592 = vpop.trf.xlu0
        %v593 = vpop.trf.xlu0
        %v594 = vpop.trf.xlu0
        %595 = vst.msk [vmem:[#allocation2] sm:$0xff] %vm242, %v579
        %v596 = vld [vmem:[#allocation2] ss:$2 sm:$0xf]
        %598 = vrot.lane.b32.xlu0 %v596, 8
        %v599 = vpop.permute.xlu0 %598
        %601 = vst.msk [vmem:[%s361] sm:$0xf] %vm479, %v599
        %v602 = vld [vmem:[%s247] ss:$2 sm:$0xf]
        %604 = vrot.lane.b32.xlu0 %v602, 12
        %v605 = vpop.permute.xlu0 %604
        %607 = vst.msk [vmem:[%s361] sm:$0xf] %vm486, %v605
        %v608 = vld [vmem:[%s171 + $0x7] sm:$0x1]
        %v609 = vld [vmem:[%s171 + $0x17] sm:$0x1]
        %v610 = vld [vmem:[%s171 + $0x27] sm:$0x1]
        %v611 = vld [vmem:[%s171 + $0x37] sm:$0x1]
        %v616 = vrot.slane %v609, 7
        %v617 = vsel %vm201, %v616, %v608
        %v618 = vrot.slane %v610, 6
        %v619 = vsel %vm204, %v618, %v617
        %v620 = vrot.slane %v611, 5
        %v621 = vsel %vm207, %v620, %v619
        %623 = vxpose.xlu0.b32.start [1/16] %v621, 128
        %624 = vxpose.xlu0.b32.cont [2/16] 0.0, 128
        %625 = vxpose.xlu0.b32.cont [3/16] 0.0, 128
        %626 = vxpose.xlu0.b32.cont [4/16] 0.0, 128
        %627 = vxpose.xlu0.b32.cont [5/16] 0.0, 128
        %628 = vxpose.xlu0.b32.cont [6/16] 0.0, 128
        %629 = vxpose.xlu0.b32.cont [7/16] 0.0, 128
        %630 = vxpose.xlu0.b32.cont [8/16] 0.0, 128
        %631 = vxpose.xlu0.b32.cont [9/16] 0.0, 128
        %632 = vxpose.xlu0.b32.cont [10/16] 0.0, 128
        %633 = vxpose.xlu0.b32.cont [11/16] 0.0, 128
        %634 = vxpose.xlu0.b32.cont [12/16] 0.0, 128
        %635 = vxpose.xlu0.b32.cont [13/16] 0.0, 128
        %636 = vxpose.xlu0.b32.cont [14/16] 0.0, 128
        %637 = vxpose.xlu0.b32.cont [15/16] 0.0, 128
        %638 = vxpose.xlu0.b32.end [16/16] 0.0, 128
        %v639 = vpop.trf.xlu0
        %v640 = vpop.trf.xlu0
        %v641 = vpop.trf.xlu0
        %v642 = vpop.trf.xlu0
        %v643 = vpop.trf.xlu0
        %v644 = vpop.trf.xlu0
        %v645 = vpop.trf.xlu0
        %v646 = vpop.trf.xlu0
        %v647 = vpop.trf.xlu0
        %v648 = vpop.trf.xlu0
        %v649 = vpop.trf.xlu0
        %v650 = vpop.trf.xlu0
        %v651 = vpop.trf.xlu0
        %v652 = vpop.trf.xlu0
        %v653 = vpop.trf.xlu0
        %v654 = vpop.trf.xlu0
        %655 = vst.msk [vmem:[#allocation2] sm:$0xff] %vm242, %v639
        %v656 = vld [vmem:[#allocation2] ss:$2 sm:$0xf]
        %658 = vrot.lane.b32.xlu0 %v656, 8
        %v659 = vpop.permute.xlu0 %658
        %661 = vst.msk [vmem:[%s418] sm:$0xf] %vm479, %v659
        %v662 = vld [vmem:[%s247] ss:$2 sm:$0xf]
        %664 = vrot.lane.b32.xlu0 %v662, 12
        %v665 = vpop.permute.xlu0 %664
        %667 = vst.msk [vmem:[%s418] sm:$0xf] %vm486, %v665
        %s668 = scalar_lea.vmem %s171, 8 [#allocation3]
        %v669 = vld [vmem:[%s668] sm:$0x1]
        %v670 = vld [vmem:[%s668 + $0x10] sm:$0x1]
        %v671 = vld [vmem:[%s668 + $0x20] sm:$0x1]
        %v672 = vld [vmem:[%s668 + $0x30] sm:$0x1]
        %v677 = vrot.slane %v670, 7
        %v678 = vsel %vm201, %v677, %v669
        %v679 = vrot.slane %v671, 6
        %v680 = vsel %vm204, %v679, %v678
        %v681 = vrot.slane %v672, 5
        %v682 = vsel %vm207, %v681, %v680
        %684 = vxpose.xlu0.b32.start [1/16] %v682, 128
        %685 = vxpose.xlu0.b32.cont [2/16] 0.0, 128
        %686 = vxpose.xlu0.b32.cont [3/16] 0.0, 128
        %687 = vxpose.xlu0.b32.cont [4/16] 0.0, 128
        %688 = vxpose.xlu0.b32.cont [5/16] 0.0, 128
        %689 = vxpose.xlu0.b32.cont [6/16] 0.0, 128
        %690 = vxpose.xlu0.b32.cont [7/16] 0.0, 128
        %691 = vxpose.xlu0.b32.cont [8/16] 0.0, 128
        %692 = vxpose.xlu0.b32.cont [9/16] 0.0, 128
        %693 = vxpose.xlu0.b32.cont [10/16] 0.0, 128
        %694 = vxpose.xlu0.b32.cont [11/16] 0.0, 128
        %695 = vxpose.xlu0.b32.cont [12/16] 0.0, 128
        %696 = vxpose.xlu0.b32.cont [13/16] 0.0, 128
        %697 = vxpose.xlu0.b32.cont [14/16] 0.0, 128
        %698 = vxpose.xlu0.b32.cont [15/16] 0.0, 128
        %699 = vxpose.xlu0.b32.end [16/16] 0.0, 128
        %v700 = vpop.trf.xlu0
        %v701 = vpop.trf.xlu0
        %v702 = vpop.trf.xlu0
        %v703 = vpop.trf.xlu0
        %v704 = vpop.trf.xlu0
        %v705 = vpop.trf.xlu0
        %v706 = vpop.trf.xlu0
        %v707 = vpop.trf.xlu0
        %v708 = vpop.trf.xlu0
        %v709 = vpop.trf.xlu0
        %v710 = vpop.trf.xlu0
        %v711 = vpop.trf.xlu0
        %v712 = vpop.trf.xlu0
        %v713 = vpop.trf.xlu0
        %v714 = vpop.trf.xlu0
        %v715 = vpop.trf.xlu0
        %716 = vst.msk [vmem:[#allocation2] sm:$0xff] %vm242, %v700
        %v717 = vld [vmem:[#allocation2] ss:$2 sm:$0xf]
        %719 = vrot.lane.b32.xlu0 %v717, 16
        %v720 = vpop.permute.xlu0 %719
        %vm722 = vcmask 158848
        %723 = vst.msk [vmem:[%s189] sm:$0xf] %vm722, %v720
        %v724 = vld [vmem:[%s247] ss:$2 sm:$0xf]
        %726 = vrot.lane.b32.xlu0 %v724, 20
        %v727 = vpop.permute.xlu0 %726
        %vm729 = vcmask 191648
        %730 = vst.msk [vmem:[%s189] sm:$0xf] %vm729, %v727
        %v731 = vld [vmem:[%s668 + $0x2] sm:$0x1]
        %v732 = vld [vmem:[%s668 + $0x12] sm:$0x1]
        %v733 = vld [vmem:[%s668 + $0x22] sm:$0x1]
        %v734 = vld [vmem:[%s668 + $0x32] sm:$0x1]
        %v739 = vrot.slane %v732, 7
        %v740 = vsel %vm201, %v739, %v731
        %v741 = vrot.slane %v733, 6
        %v742 = vsel %vm204, %v741, %v740
        %v743 = vrot.slane %v734, 5
        %v744 = vsel %vm207, %v743, %v742
        %746 = vxpose.xlu0.b32.start [1/16] %v744, 128
        %747 = vxpose.xlu0.b32.cont [2/16] 0.0, 128
        %748 = vxpose.xlu0.b32.cont [3/16] 0.0, 128
        %749 = vxpose.xlu0.b32.cont [4/16] 0.0, 128
        %750 = vxpose.xlu0.b32.cont [5/16] 0.0, 128
        %751 = vxpose.xlu0.b32.cont [6/16] 0.0, 128
        %752 = vxpose.xlu0.b32.cont [7/16] 0.0, 128
        %753 = vxpose.xlu0.b32.cont [8/16] 0.0, 128
        %754 = vxpose.xlu0.b32.cont [9/16] 0.0, 128
        %755 = vxpose.xlu0.b32.cont [10/16] 0.0, 128
        %756 = vxpose.xlu0.b32.cont [11/16] 0.0, 128
        %757 = vxpose.xlu0.b32.cont [12/16] 0.0, 128
        %758 = vxpose.xlu0.b32.cont [13/16] 0.0, 128
        %759 = vxpose.xlu0.b32.cont [14/16] 0.0, 128
        %760 = vxpose.xlu0.b32.cont [15/16] 0.0, 128
        %761 = vxpose.xlu0.b32.end [16/16] 0.0, 128
        %v762 = vpop.trf.xlu0
        %v763 = vpop.trf.xlu0
        %v764 = vpop.trf.xlu0
        %v765 = vpop.trf.xlu0
        %v766 = vpop.trf.xlu0
        %v767 = vpop.trf.xlu0
        %v768 = vpop.trf.xlu0
        %v769 = vpop.trf.xlu0
        %v770 = vpop.trf.xlu0
        %v771 = vpop.trf.xlu0
        %v772 = vpop.trf.xlu0
        %v773 = vpop.trf.xlu0
        %v774 = vpop.trf.xlu0
        %v775 = vpop.trf.xlu0
        %v776 = vpop.trf.xlu0
        %v777 = vpop.trf.xlu0
        %778 = vst.msk [vmem:[#allocation2] sm:$0xff] %vm242, %v762
        %v779 = vld [vmem:[#allocation2] ss:$2 sm:$0xf]
        %781 = vrot.lane.b32.xlu0 %v779, 16
        %v782 = vpop.permute.xlu0 %781
        %784 = vst.msk [vmem:[%s304] sm:$0xf] %vm722, %v782
        %v785 = vld [vmem:[%s247] ss:$2 sm:$0xf]
        %787 = vrot.lane.b32.xlu0 %v785, 20
        %v788 = vpop.permute.xlu0 %787
        %790 = vst.msk [vmem:[%s304] sm:$0xf] %vm729, %v788
        %v791 = vld [vmem:[%s668 + $0x4] sm:$0x1]
        %v792 = vld [vmem:[%s668 + $0x14] sm:$0x1]
        %v793 = vld [vmem:[%s668 + $0x24] sm:$0x1]
        %v794 = vld [vmem:[%s668 + $0x34] sm:$0x1]
        %v799 = vrot.slane %v792, 7
        %v800 = vsel %vm201, %v799, %v791
        %v801 = vrot.slane %v793, 6
        %v802 = vsel %vm204, %v801, %v800
        %v803 = vrot.slane %v794, 5
        %v804 = vsel %vm207, %v803, %v802
        %806 = vxpose.xlu0.b32.start [1/16] %v804, 128
        %807 = vxpose.xlu0.b32.cont [2/16] 0.0, 128
        %808 = vxpose.xlu0.b32.cont [3/16] 0.0, 128
        %809 = vxpose.xlu0.b32.cont [4/16] 0.0, 128
        %810 = vxpose.xlu0.b32.cont [5/16] 0.0, 128
        %811 = vxpose.xlu0.b32.cont [6/16] 0.0, 128
        %812 = vxpose.xlu0.b32.cont [7/16] 0.0, 128
        %813 = vxpose.xlu0.b32.cont [8/16] 0.0, 128
        %814 = vxpose.xlu0.b32.cont [9/16] 0.0, 128
        %815 = vxpose.xlu0.b32.cont [10/16] 0.0, 128
        %816 = vxpose.xlu0.b32.cont [11/16] 0.0, 128
        %817 = vxpose.xlu0.b32.cont [12/16] 0.0, 128
        %818 = vxpose.xlu0.b32.cont [13/16] 0.0, 128
        %819 = vxpose.xlu0.b32.cont [14/16] 0.0, 128
        %820 = vxpose.xlu0.b32.cont [15/16] 0.0, 128
        %821 = vxpose.xlu0.b32.end [16/16] 0.0, 128
        %v822 = vpop.trf.xlu0
        %v823 = vpop.trf.xlu0
        %v824 = vpop.trf.xlu0
        %v825 = vpop.trf.xlu0
        %v826 = vpop.trf.xlu0
        %v827 = vpop.trf.xlu0
        %v828 = vpop.trf.xlu0
        %v829 = vpop.trf.xlu0
        %v830 = vpop.trf.xlu0
        %v831 = vpop.trf.xlu0
        %v832 = vpop.trf.xlu0
        %v833 = vpop.trf.xlu0
        %v834 = vpop.trf.xlu0
        %v835 = vpop.trf.xlu0
        %v836 = vpop.trf.xlu0
        %v837 = vpop.trf.xlu0
        %838 = vst.msk [vmem:[#allocation2] sm:$0xff] %vm242, %v822
        %v839 = vld [vmem:[#allocation2] ss:$2 sm:$0xf]
        %841 = vrot.lane.b32.xlu0 %v839, 16
        %v842 = vpop.permute.xlu0 %841
        %844 = vst.msk [vmem:[%s361] sm:$0xf] %vm722, %v842
        %v845 = vld [vmem:[%s247] ss:$2 sm:$0xf]
        %847 = vrot.lane.b32.xlu0 %v845, 20
        %v848 = vpop.permute.xlu0 %847
        %850 = vst.msk [vmem:[%s361] sm:$0xf] %vm729, %v848
        %v851 = vld [vmem:[%s668 + $0x6] sm:$0x1]
        %v852 = vld [vmem:[%s668 + $0x16] sm:$0x1]
        %v853 = vld [vmem:[%s668 + $0x26] sm:$0x1]
        %v854 = vld [vmem:[%s668 + $0x36] sm:$0x1]
        %v859 = vrot.slane %v852, 7
        %v860 = vsel %vm201, %v859, %v851
        %v861 = vrot.slane %v853, 6
        %v862 = vsel %vm204, %v861, %v860
        %v863 = vrot.slane %v854, 5
        %v864 = vsel %vm207, %v863, %v862
        %866 = vxpose.xlu0.b32.start [1/16] %v864, 128
        %867 = vxpose.xlu0.b32.cont [2/16] 0.0, 128
        %868 = vxpose.xlu0.b32.cont [3/16] 0.0, 128
        %869 = vxpose.xlu0.b32.cont [4/16] 0.0, 128
        %870 = vxpose.xlu0.b32.cont [5/16] 0.0, 128
        %871 = vxpose.xlu0.b32.cont [6/16] 0.0, 128
        %872 = vxpose.xlu0.b32.cont [7/16] 0.0, 128
        %873 = vxpose.xlu0.b32.cont [8/16] 0.0, 128
        %874 = vxpose.xlu0.b32.cont [9/16] 0.0, 128
        %875 = vxpose.xlu0.b32.cont [10/16] 0.0, 128
        %876 = vxpose.xlu0.b32.cont [11/16] 0.0, 128
        %877 = vxpose.xlu0.b32.cont [12/16] 0.0, 128
        %878 = vxpose.xlu0.b32.cont [13/16] 0.0, 128
        %879 = vxpose.xlu0.b32.cont [14/16] 0.0, 128
        %880 = vxpose.xlu0.b32.cont [15/16] 0.0, 128
        %881 = vxpose.xlu0.b32.end [16/16] 0.0, 128
        %v882 = vpop.trf.xlu0
        %v883 = vpop.trf.xlu0
        %v884 = vpop.trf.xlu0
        %v885 = vpop.trf.xlu0
        %v886 = vpop.trf.xlu0
        %v887 = vpop.trf.xlu0
        %v888 = vpop.trf.xlu0
        %v889 = vpop.trf.xlu0
        %v890 = vpop.trf.xlu0
        %v891 = vpop.trf.xlu0
        %v892 = vpop.trf.xlu0
        %v893 = vpop.trf.xlu0
        %v894 = vpop.trf.xlu0
        %v895 = vpop.trf.xlu0
        %v896 = vpop.trf.xlu0
        %v897 = vpop.trf.xlu0
        %898 = vst.msk [vmem:[#allocation2] sm:$0xff] %vm242, %v882
        %v899 = vld [vmem:[#allocation2] ss:$2 sm:$0xf]
        %901 = vrot.lane.b32.xlu0 %v899, 16
        %v902 = vpop.permute.xlu0 %901
        %904 = vst.msk [vmem:[%s418] sm:$0xf] %vm722, %v902
        %v905 = vld [vmem:[%s247] ss:$2 sm:$0xf]
        %907 = vrot.lane.b32.xlu0 %v905, 20
        %v908 = vpop.permute.xlu0 %907
        %910 = vst.msk [vmem:[%s418] sm:$0xf] %vm729, %v908
        %v911 = vld [vmem:[%s668 + $0x1] sm:$0x1]
        %v912 = vld [vmem:[%s668 + $0x11] sm:$0x1]
        %v913 = vld [vmem:[%s668 + $0x21] sm:$0x1]
        %v914 = vld [vmem:[%s668 + $0x31] sm:$0x1]
        %v919 = vrot.slane %v912, 7
        %v920 = vsel %vm201, %v919, %v911
        %v921 = vrot.slane %v913, 6
        %v922 = vsel %vm204, %v921, %v920
        %v923 = vrot.slane %v914, 5
        %v924 = vsel %vm207, %v923, %v922
        %926 = vxpose.xlu0.b32.start [1/16] %v924, 128
        %927 = vxpose.xlu0.b32.cont [2/16] 0.0, 128
        %928 = vxpose.xlu0.b32.cont [3/16] 0.0, 128
        %929 = vxpose.xlu0.b32.cont [4/16] 0.0, 128
        %930 = vxpose.xlu0.b32.cont [5/16] 0.0, 128
        %931 = vxpose.xlu0.b32.cont [6/16] 0.0, 128
        %932 = vxpose.xlu0.b32.cont [7/16] 0.0, 128
        %933 = vxpose.xlu0.b32.cont [8/16] 0.0, 128
        %934 = vxpose.xlu0.b32.cont [9/16] 0.0, 128
        %935 = vxpose.xlu0.b32.cont [10/16] 0.0, 128
        %936 = vxpose.xlu0.b32.cont [11/16] 0.0, 128
        %937 = vxpose.xlu0.b32.cont [12/16] 0.0, 128
        %938 = vxpose.xlu0.b32.cont [13/16] 0.0, 128
        %939 = vxpose.xlu0.b32.cont [14/16] 0.0, 128
        %940 = vxpose.xlu0.b32.cont [15/16] 0.0, 128
        %941 = vxpose.xlu0.b32.end [16/16] 0.0, 128
        %v942 = vpop.trf.xlu0
        %v943 = vpop.trf.xlu0
        %v944 = vpop.trf.xlu0
        %v945 = vpop.trf.xlu0
        %v946 = vpop.trf.xlu0
        %v947 = vpop.trf.xlu0
        %v948 = vpop.trf.xlu0
        %v949 = vpop.trf.xlu0
        %v950 = vpop.trf.xlu0
        %v951 = vpop.trf.xlu0
        %v952 = vpop.trf.xlu0
        %v953 = vpop.trf.xlu0
        %v954 = vpop.trf.xlu0
        %v955 = vpop.trf.xlu0
        %v956 = vpop.trf.xlu0
        %v957 = vpop.trf.xlu0
        %958 = vst.msk [vmem:[#allocation2] sm:$0xff] %vm242, %v942
        %v959 = vld [vmem:[#allocation2] ss:$2 sm:$0xf]
        %961 = vrot.lane.b32.xlu0 %v959, 24
        %v962 = vpop.permute.xlu0 %961
        %vm964 = vcmask 224448
        %965 = vst.msk [vmem:[%s189] sm:$0xf] %vm964, %v962
        %v966 = vld [vmem:[%s247] ss:$2 sm:$0xf]
        %968 = vrot.lane.b32.xlu0 %v966, 28
        %v969 = vpop.permute.xlu0 %968
        %vm971 = vcmask 257248
        %972 = vst.msk [vmem:[%s189] sm:$0xf] %vm971, %v969
        %v973 = vld [vmem:[%s668 + $0x3] sm:$0x1]
        %v974 = vld [vmem:[%s668 + $0x13] sm:$0x1]
        %v975 = vld [vmem:[%s668 + $0x23] sm:$0x1]
        %v976 = vld [vmem:[%s668 + $0x33] sm:$0x1]
        %v981 = vrot.slane %v974, 7
        %v982 = vsel %vm201, %v981, %v973
        %v983 = vrot.slane %v975, 6
        %v984 = vsel %vm204, %v983, %v982
        %v985 = vrot.slane %v976, 5
        %v986 = vsel %vm207, %v985, %v984
        %988 = vxpose.xlu0.b32.start [1/16] %v986, 128
        %989 = vxpose.xlu0.b32.cont [2/16] 0.0, 128
        %990 = vxpose.xlu0.b32.cont [3/16] 0.0, 128
        %991 = vxpose.xlu0.b32.cont [4/16] 0.0, 128
        %992 = vxpose.xlu0.b32.cont [5/16] 0.0, 128
        %993 = vxpose.xlu0.b32.cont [6/16] 0.0, 128
        %994 = vxpose.xlu0.b32.cont [7/16] 0.0, 128
        %995 = vxpose.xlu0.b32.cont [8/16] 0.0, 128
        %996 = vxpose.xlu0.b32.cont [9/16] 0.0, 128
        %997 = vxpose.xlu0.b32.cont [10/16] 0.0, 128
        %998 = vxpose.xlu0.b32.cont [11/16] 0.0, 128
        %999 = vxpose.xlu0.b32.cont [12/16] 0.0, 128
        %1000 = vxpose.xlu0.b32.cont [13/16] 0.0, 128
        %1001 = vxpose.xlu0.b32.cont [14/16] 0.0, 128
        %1002 = vxpose.xlu0.b32.cont [15/16] 0.0, 128
        %1003 = vxpose.xlu0.b32.end [16/16] 0.0, 128
        %v1004 = vpop.trf.xlu0
        %v1005 = vpop.trf.xlu0
        %v1006 = vpop.trf.xlu0
        %v1007 = vpop.trf.xlu0
        %v1008 = vpop.trf.xlu0
        %v1009 = vpop.trf.xlu0
        %v1010 = vpop.trf.xlu0
        %v1011 = vpop.trf.xlu0
        %v1012 = vpop.trf.xlu0
        %v1013 = vpop.trf.xlu0
        %v1014 = vpop.trf.xlu0
        %v1015 = vpop.trf.xlu0
        %v1016 = vpop.trf.xlu0
        %v1017 = vpop.trf.xlu0
        %v1018 = vpop.trf.xlu0
        %v1019 = vpop.trf.xlu0
        %1020 = vst.msk [vmem:[#allocation2] sm:$0xff] %vm242, %v1004
        %v1021 = vld [vmem:[#allocation2] ss:$2 sm:$0xf]
        %1023 = vrot.lane.b32.xlu0 %v1021, 24
        %v1024 = vpop.permute.xlu0 %1023
        %1026 = vst.msk [vmem:[%s304] sm:$0xf] %vm964, %v1024
        %v1027 = vld [vmem:[%s247] ss:$2 sm:$0xf]
        %1029 = vrot.lane.b32.xlu0 %v1027, 28
        %v1030 = vpop.permute.xlu0 %1029
        %1032 = vst.msk [vmem:[%s304] sm:$0xf] %vm971, %v1030
        %v1033 = vld [vmem:[%s668 + $0x5] sm:$0x1]
        %v1034 = vld [vmem:[%s668 + $0x15] sm:$0x1]
        %v1035 = vld [vmem:[%s668 + $0x25] sm:$0x1]
        %v1036 = vld [vmem:[%s668 + $0x35] sm:$0x1]
        %v1041 = vrot.slane %v1034, 7
        %v1042 = vsel %vm201, %v1041, %v1033
        %v1043 = vrot.slane %v1035, 6
        %v1044 = vsel %vm204, %v1043, %v1042
        %v1045 = vrot.slane %v1036, 5
        %v1046 = vsel %vm207, %v1045, %v1044
        %1048 = vxpose.xlu0.b32.start [1/16] %v1046, 128
        %1049 = vxpose.xlu0.b32.cont [2/16] 0.0, 128
        %1050 = vxpose.xlu0.b32.cont [3/16] 0.0, 128
        %1051 = vxpose.xlu0.b32.cont [4/16] 0.0, 128
        %1052 = vxpose.xlu0.b32.cont [5/16] 0.0, 128
        %1053 = vxpose.xlu0.b32.cont [6/16] 0.0, 128
        %1054 = vxpose.xlu0.b32.cont [7/16] 0.0, 128
        %1055 = vxpose.xlu0.b32.cont [8/16] 0.0, 128
        %1056 = vxpose.xlu0.b32.cont [9/16] 0.0, 128
        %1057 = vxpose.xlu0.b32.cont [10/16] 0.0, 128
        %1058 = vxpose.xlu0.b32.cont [11/16] 0.0, 128
        %1059 = vxpose.xlu0.b32.cont [12/16] 0.0, 128
        %1060 = vxpose.xlu0.b32.cont [13/16] 0.0, 128
        %1061 = vxpose.xlu0.b32.cont [14/16] 0.0, 128
        %1062 = vxpose.xlu0.b32.cont [15/16] 0.0, 128
        %1063 = vxpose.xlu0.b32.end [16/16] 0.0, 128
        %v1064 = vpop.trf.xlu0
        %v1065 = vpop.trf.xlu0
        %v1066 = vpop.trf.xlu0
        %v1067 = vpop.trf.xlu0
        %v1068 = vpop.trf.xlu0
        %v1069 = vpop.trf.xlu0
        %v1070 = vpop.trf.xlu0
        %v1071 = vpop.trf.xlu0
        %v1072 = vpop.trf.xlu0
        %v1073 = vpop.trf.xlu0
        %v1074 = vpop.trf.xlu0
        %v1075 = vpop.trf.xlu0
        %v1076 = vpop.trf.xlu0
        %v1077 = vpop.trf.xlu0
        %v1078 = vpop.trf.xlu0
        %v1079 = vpop.trf.xlu0
        %1080 = vst.msk [vmem:[#allocation2] sm:$0xff] %vm242, %v1064
        %v1081 = vld [vmem:[#allocation2] ss:$2 sm:$0xf]
        %1083 = vrot.lane.b32.xlu0 %v1081, 24
        %v1084 = vpop.permute.xlu0 %1083
        %1086 = vst.msk [vmem:[%s361] sm:$0xf] %vm964, %v1084
        %v1087 = vld [vmem:[%s247] ss:$2 sm:$0xf]
        %1089 = vrot.lane.b32.xlu0 %v1087, 28
        %v1090 = vpop.permute.xlu0 %1089
        %1092 = vst.msk [vmem:[%s361] sm:$0xf] %vm971, %v1090
        %v1093 = vld [vmem:[%s668 + $0x7] sm:$0x1]
        %v1094 = vld [vmem:[%s668 + $0x17] sm:$0x1]
        %v1095 = vld [vmem:[%s668 + $0x27] sm:$0x1]
        %v1096 = vld [vmem:[%s668 + $0x37] sm:$0x1]
        %v1101 = vrot.slane %v1094, 7
        %v1102 = vsel %vm201, %v1101, %v1093
        %v1103 = vrot.slane %v1095, 6
        %v1104 = vsel %vm204, %v1103, %v1102
        %v1105 = vrot.slane %v1096, 5
        %v1106 = vsel %vm207, %v1105, %v1104
        %1108 = vxpose.xlu0.b32.start [1/16] %v1106, 128
        %1109 = vxpose.xlu0.b32.cont [2/16] 0.0, 128
        %1110 = vxpose.xlu0.b32.cont [3/16] 0.0, 128
        %1111 = vxpose.xlu0.b32.cont [4/16] 0.0, 128
        %1112 = vxpose.xlu0.b32.cont [5/16] 0.0, 128
        %1113 = vxpose.xlu0.b32.cont [6/16] 0.0, 128
        %1114 = vxpose.xlu0.b32.cont [7/16] 0.0, 128
        %1115 = vxpose.xlu0.b32.cont [8/16] 0.0, 128
        %1116 = vxpose.xlu0.b32.cont [9/16] 0.0, 128
        %1117 = vxpose.xlu0.b32.cont [10/16] 0.0, 128
        %1118 = vxpose.xlu0.b32.cont [11/16] 0.0, 128
        %1119 = vxpose.xlu0.b32.cont [12/16] 0.0, 128
        %1120 = vxpose.xlu0.b32.cont [13/16] 0.0, 128
        %1121 = vxpose.xlu0.b32.cont [14/16] 0.0, 128
        %1122 = vxpose.xlu0.b32.cont [15/16] 0.0, 128
        %1123 = vxpose.xlu0.b32.end [16/16] 0.0, 128
        %v1124 = vpop.trf.xlu0
        %v1125 = vpop.trf.xlu0
        %v1126 = vpop.trf.xlu0
        %v1127 = vpop.trf.xlu0
        %v1128 = vpop.trf.xlu0
        %v1129 = vpop.trf.xlu0
        %v1130 = vpop.trf.xlu0
        %v1131 = vpop.trf.xlu0
        %v1132 = vpop.trf.xlu0
        %v1133 = vpop.trf.xlu0
        %v1134 = vpop.trf.xlu0
        %v1135 = vpop.trf.xlu0
        %v1136 = vpop.trf.xlu0
        %v1137 = vpop.trf.xlu0
        %v1138 = vpop.trf.xlu0
        %v1139 = vpop.trf.xlu0
        %1140 = vst.msk [vmem:[#allocation2] sm:$0xff] %vm242, %v1124
        %v1141 = vld [vmem:[#allocation2] ss:$2 sm:$0xf]
        %1143 = vrot.lane.b32.xlu0 %v1141, 24
        %v1144 = vpop.permute.xlu0 %1143
        %1146 = vst.msk [vmem:[%s418] sm:$0xf] %vm964, %v1144
        %v1147 = vld [vmem:[%s247] ss:$2 sm:$0xf]
        %1149 = vrot.lane.b32.xlu0 %v1147, 28
        %v1150 = vpop.permute.xlu0 %1149
        %1152 = vst.msk [vmem:[%s418] sm:$0xf] %vm971, %v1150
        %s1153 = sand.u32 %s79, 1
        %s1154 = scalar_lea.sflag [#allocation5], %s1153
        %s1155 = sand.u32 %s79, 1
        %s1156 = smul.addr %s1155, 16
        %s1157 = scalar_lea.vmem [#allocation6], %s1156
        // Predicated region
        $region29: #{tpu_custom_call.1} parent=23 // pred_check
          %p1158 = pneg %p89
        $region30: #{tpu_custom_call.1} parent=23 // pred_check_branch
          %1160 = sbr.rel (%p1158) target = $region32
        $region31: #{tpu_custom_call.1} parent=23 // pred_region
          %s1161 = smul.u32 4, %s25
          %s1163 = ssub.s32 256, 256
          %1164 = vsyncadd %s1154, %s1163
          %s1165 = smul.addr %s24, 4
          %s1166 = sadd.s32 %s1161, %s1165
          %s1167 = smul.addr %s23, 8
          %s1168 = sadd.s32 %s1166, %s1167
          %s1169 = smul.addr %s1168, 64
          %s1170 = scalar_lea.hbm %s1, %s1169
          %s1171 = sshll.u32 %s1157, 4
          %s1172 = int_to_ptr.vmem [resolvable:$true] %s1171
          %1177 = dma.vmem_to_hbm [thread:$0]  %s1172, 256, %s1170, %s1154, 64, 64, 4
        $region32: #{tpu_custom_call.1} parent=23 // pred_fallthru
          _
      $region24: #{tpu_custom_call.1} parent=5 // pred_fallthru
        _
      %p1178 = scmp.le.s32.totalorder 2, %s13
      // Predicated region
      $region33: #{tpu_custom_call.1} parent=5 // pred_check
        %p1179 = pneg %p1178
      $region34: #{tpu_custom_call.1} parent=5 // pred_check_branch
        %1181 = sbr.rel (%p1179) target = $region36
      $region35: #{tpu_custom_call.1} parent=5 // pred_region
        %s1182 = ssub.s32 %s13, 2
        // Predicated region
        $region37: #{tpu_custom_call.1} parent=35 // pred_check
          %p1183 = pneg %p95
        $region38: #{tpu_custom_call.1} parent=35 // pred_check_branch
          %1185 = sbr.rel (%p1183) target = $region40
        $region39: #{tpu_custom_call.1} parent=35 // pred_region
          %s1186 = sand.u32 %s80, 1
          %s1187 = scalar_lea.sflag [#allocation5], %s1186
          %s1188 = sand.u32 %s80, 1
          %s1189 = smul.addr %s1188, 16
          %s1190 = scalar_lea.vmem [#allocation6], %s1189
          %1191 = dma.done %s1187, 256
        $region40: #{tpu_custom_call.1} parent=35 // pred_fallthru
          _
      $region36: #{tpu_custom_call.1} parent=5 // pred_fallthru
        _
    $region6: #{tpu_custom_call.1} parent=1 // loop_footer
      %s17 = sadd.s32 1, %s13
    $region7: #{tpu_custom_call.1} parent=1 // loop_footer_branch
      %12 = sbr.rel target = $region3
    $region8: #{tpu_custom_call.1} parent=1 // loop_exit
      _
    %1192 = vsyncpa [#allocation4], 1
    %s1193 = scalar_lea.sflag [#allocation4], 1
    %1194 = vsyncpa %s1193, 1
    %1195 = vsyncpa [#allocation5], 1
    %s1196 = scalar_lea.sflag [#allocation5], 1
    %1197 = vsyncpa %s1196, 1

</llo_original>
